<compile_context>
chip_gen: v6e
topology: v6e:2x2x1
jax: 0.10.0
libtpu: 0.0.40
codegen_flags: <defaults>
</compile_context>

<pallas_src>
import jax
import jax.numpy as jnp
from jax import lax
from jax.experimental import pallas as pl
from jax.experimental.pallas import tpu as pltpu

INPUT_DIM = 784           # full last dim of x; multiple of 8 (sublane-OK)
HIDDEN1 = 512
HIDDEN_DIM = 256
LATENT_DIM = 64
LATENT_PAD = 128          # mu | logvar packed into one 128-lane block
CLS_HIDDEN = 128
NUM_CLASSES = 10
LANE = 128                # packed z|logits output width


def _round_up(x, m):
    return ((x + m - 1) // m) * m


def _vae_classifier_kernel(
    x_ref, eps_ref,
    w1_ref, b1_ref, w2_ref, b2_ref,
    wml_ref, bml_ref,
    wc1_ref, bc1_ref, wc2_ref, bc2_ref,
    out_ref,
):
    bf16 = jnp.bfloat16
    f32 = jnp.float32

    # Encoder: 784 -> 512 -> 256. bf16 operands on the MXU, f32 accumulate;
    # bias adds / ReLU stay in f32 on the VPU. x arrives already in bf16.
    h1 = jnp.dot(x_ref[...], w1_ref[...], preferred_element_type=f32)
    h1 = jnp.maximum(h1 + b1_ref[...], 0.0)
    h2 = jnp.dot(h1.astype(bf16), w2_ref[...], preferred_element_type=f32)
    h2 = jnp.maximum(h2 + b2_ref[...], 0.0)

    # Fused latent heads: single lane-dense 256x128 GEMM.
    # lanes [0,64) = mu, lanes [64,128) = logvar.
    ml = jnp.dot(h2.astype(bf16), wml_ref[...], preferred_element_type=f32)
    ml = ml + bml_ref[...]

    # Reparameterize: z = mu + eps * exp(0.5 * logvar).
    # Rotate logvar into the mu lanes (XLU slot, effectively free; shift = 64
    # on a 128-lane axis, so the rotation direction is irrelevant) and mask
    # the other half before the exp so no garbage values reach the EUP.
    lane = lax.broadcasted_iota(jnp.int32, ml.shape, 1)
    rolled = pltpu.roll(ml, shift=LATENT_DIM, axis=1)          # lanes [0,64) = logvar
    logvar_lo = jnp.where(lane < LATENT_DIM, rolled, 0.0)
    std_lo = jnp.exp(0.5 * logvar_lo)                          # lanes [0,64) = std, rest = 1
    # Invariant (enforced by the wrapper): eps lanes [64,128) are zero, so:
    #   lanes [0,64)   -> mu + eps * std   (= z)
    #   lanes [64,128) -> logvar           (killed below by zero Wc1 rows / select)
    z_packed = ml + eps_ref[...].astype(f32) * std_lo

    # Classifier head. Invariant (enforced by prepare_params): Wc1 rows
    # [64,128) are zero, so the packed logvar lanes contribute nothing.
    c1 = jnp.dot(z_packed.astype(bf16), wc1_ref[...], preferred_element_type=f32)
    c1 = jnp.maximum(c1 + bc1_ref[...], 0.0)
    # Wc2/bc2 were pre-shifted into lanes [64,74); all other lanes are zero.
    logits = jnp.dot(c1.astype(bf16), wc2_ref[...], preferred_element_type=f32)
    logits = logits + bc2_ref[...]

    # Single packed, lane-dense output: z in lanes [0,64), logits in [64,74).
    out_ref[...] = jnp.where(lane < LATENT_DIM, z_packed, logits).astype(out_ref.dtype)

    # TODO(synk): the VAE decoder (latent -> 784 + Sigmoid) is dead code in
    # VAEClassifier.forward (its output is discarded), so it is omitted here.


def prepare_params(params):
    """Fuse / pad / cast logical f32 params ([in,out] weights, [1,out] biases)
    into the kernel layout. Returns the tuple in kernel argument order."""
    (w1, b1, w2, b2, wmu, bmu, wlv, blv, wc1, bc1, wc2, bc2) = params
    f32 = jnp.float32
    bf16 = jnp.bfloat16

    # Fuse mu | logvar heads into one 128-wide GEMM.
    wml = jnp.concatenate([wmu, wlv], axis=1)
    bml = jnp.concatenate([bmu, blv], axis=1)
    # Classifier input padded 64 -> 128 (zero rows kill the packed logvar lanes).
    wc1p = jnp.zeros((LATENT_PAD, CLS_HIDDEN), f32).at[:LATENT_DIM, :].set(wc1)
    # Logits shifted into lanes [64, 74) of a 128-lane output (zero elsewhere)
    # so the kernel can pack z|logits with a single lane-select, no roll.
    wc2p = jnp.zeros((CLS_HIDDEN, LANE), f32)
    wc2p = wc2p.at[:, LATENT_DIM:LATENT_DIM + NUM_CLASSES].set(wc2)
    bc2p = jnp.zeros((1, LANE), f32)
    bc2p = bc2p.at[:, LATENT_DIM:LATENT_DIM + NUM_CLASSES].set(bc2)

    return (
        w1.astype(bf16), b1,
        w2.astype(bf16), b2,
        wml.astype(bf16), bml,
        wc1p.astype(bf16), bc1,
        wc2p.astype(bf16), bc2p,
    )


def vae_classifier_forward(x, eps, prepared_params, *, block_b=1024):
    """Fused forward pass. Returns (logits [B, 10], z [B, 64]), both f32.

    block_b: batch tile. 1024 amortizes per-step overhead and fits v7x's
    64 MiB VMEM with room to spare; v5e/v6e can use 2048 if desired.
    """
    B = x.shape[0]
    tb = min(_round_up(block_b, 8), _round_up(B, 8))
    Bp = _round_up(B, tb)

    bf16 = jnp.bfloat16

    # bf16 input stream, natural 784-lane width (full last dim -> legal block).
    # When B is already a multiple of the batch tile there is NO extra padded
    # HBM copy of x — just the cast.
    x_bf = x.astype(bf16)
    if Bp == B:
        xp = x_bf
    else:
        xp = jnp.zeros((Bp, INPUT_DIM), bf16).at[:B, :].set(x_bf)

    # eps: bf16, zero-padded to 128 lanes (lanes [64,128) MUST stay zero —
    # the kernel's packed-z trick relies on it).
    epsp = jnp.zeros((Bp, LATENT_PAD), bf16).at[:B, :LATENT_DIM].set(eps.astype(bf16))

    grid = (Bp // tb,)

    def act_spec(feat):
        return pl.BlockSpec((tb, feat), lambda i: (i, 0))

    def const_spec(arr):
        # Constant index_map -> block never changes -> stays VMEM-resident.
        return pl.BlockSpec(arr.shape, lambda i: (0, 0))

    in_specs = [act_spec(INPUT_DIM), act_spec(LATENT_PAD)]
    in_specs += [const_spec(p) for p in prepared_params]
    out_specs = pl.BlockSpec((tb, LANE), lambda i: (i, 0))

    flops = 2 * Bp * (INPUT_DIM * HIDDEN1 + HIDDEN1 * HIDDEN_DIM
                      + HIDDEN_DIM * LATENT_PAD + LATENT_PAD * CLS_HIDDEN
                      + CLS_HIDDEN * LANE)
    param_bytes = sum(int(p.size) * p.dtype.itemsize for p in prepared_params)
    bytes_accessed = Bp * (INPUT_DIM * 2 + LATENT_PAD * 2 + LANE * 4) + param_bytes

    packed = pl.pallas_call(
        _vae_classifier_kernel,
        grid=grid,
        in_specs=in_specs,
        out_specs=out_specs,
        out_shape=jax.ShapeDtypeStruct((Bp, LANE), jnp.float32),  # z | logits
        compiler_params=pltpu.CompilerParams(
            dimension_semantics=("parallel",),   # shard batch steps across TCs (v7x)
            vmem_limit_bytes=48 << 20,           # real footprint ~<20 MiB at tb=1024
        ),
        cost_estimate=pl.CostEstimate(
            flops=flops,
            transcendentals=Bp * LANE,
            bytes_accessed=bytes_accessed,
        ),
    )(xp, epsp, *prepared_params)

    logits = packed[:B, LATENT_DIM:LATENT_DIM + NUM_CLASSES]
    z = packed[:B, :LATENT_DIM]
    return logits, z


def init_params(key):
    """Deterministic parameter init. Weights stored as [in, out], biases [1, out]."""
    shapes = [
        (INPUT_DIM, HIDDEN1),      # W1
        (1, HIDDEN1),              # b1
        (HIDDEN1, HIDDEN_DIM),     # W2
        (1, HIDDEN_DIM),           # b2
        (HIDDEN_DIM, LATENT_DIM),  # Wmu
        (1, LATENT_DIM),           # bmu
        (HIDDEN_DIM, LATENT_DIM),  # Wlv
        (1, LATENT_DIM),           # blv
        (LATENT_DIM, CLS_HIDDEN),  # Wc1
        (1, CLS_HIDDEN),           # bc1
        (CLS_HIDDEN, NUM_CLASSES), # Wc2
        (1, NUM_CLASSES),          # bc2
    ]
    keys = jax.random.split(key, len(shapes))
    params = []
    for k, shp in zip(keys, shapes):
        fan_in = shp[0] if shp[0] > 1 else shp[1]
        scale = 1.0 / jnp.sqrt(jnp.float32(fan_in))
        params.append(scale * jax.random.normal(k, shp, dtype=jnp.float32))
    return params


def reference_forward(x, eps, params):
    """Pure-f32 plain-JAX reference (PyTorch semantics)."""
    (w1, b1, w2, b2, wmu, bmu, wlv, blv, wc1, bc1, wc2, bc2) = params
    h1 = jnp.maximum(x @ w1 + b1, 0.0)
    h2 = jnp.maximum(h1 @ w2 + b2, 0.0)
    mu = h2 @ wmu + bmu
    log_var = h2 @ wlv + blv
    z = mu + eps * jnp.exp(0.5 * log_var)
    c1 = jnp.maximum(z @ wc1 + bc1, 0.0)
    logits = c1 @ wc2 + bc2
    return logits, z


def reference_forward_bf16(x, eps, params):
    """Plain-JAX reference mimicking the kernel numerics (bf16 MXU operands and
    bf16 x/eps streams, f32 accumulation / elementwise)."""
    bf16 = jnp.bfloat16

    def mm(a, w):
        return jnp.dot(a.astype(bf16), w.astype(bf16),
                       preferred_element_type=jnp.float32)

    (w1, b1, w2, b2, wmu, bmu, wlv, blv, wc1, bc1, wc2, bc2) = params
    h1 = jnp.maximum(mm(x, w1) + b1, 0.0)
    h2 = jnp.maximum(mm(h1, w2) + b2, 0.0)
    mu = mm(h2, wmu) + bmu
    log_var = mm(h2, wlv) + blv
    z = mu + eps.astype(bf16).astype(jnp.float32) * jnp.exp(0.5 * log_var)
    c1 = jnp.maximum(mm(z, wc1) + bc1, 0.0)
    logits = mm(c1, wc2) + bc2
    return logits, z


if __name__ == "__main__":
    key = jax.random.PRNGKey(0)
    k_x, k_eps, k_p = jax.random.split(key, 3)

    batch = 8
    x = jax.random.normal(k_x, (batch, INPUT_DIM), dtype=jnp.float32)
    eps = jax.random.normal(k_eps, (batch, LATENT_DIM), dtype=jnp.float32)
    params = init_params(k_p)
    prepared = prepare_params(params)

    logits, z = vae_classifier_forward(x, eps, prepared)
    logits, z = jax.block_until_ready((logits, z))

    assert logits.shape == (batch, NUM_CLASSES)
    assert z.shape == (batch, LATENT_DIM)

    # Tight check vs a plain-JAX reference with identical numerics
    # (bf16 MXU operands / bf16 inputs, f32 accumulation).
    ref_logits_bf, ref_z_bf = reference_forward_bf16(x, eps, params)
    assert jnp.allclose(logits, ref_logits_bf, atol=3e-3, rtol=3e-3)
    assert jnp.allclose(z, ref_z_bf, atol=3e-3, rtol=3e-3)

    # Loose check vs the full-f32 reference (bounds total bf16 rounding error).
    ref_logits, ref_z = reference_forward(x, eps, params)
    assert jnp.allclose(logits, ref_logits, atol=1.5e-1, rtol=1.5e-1)
    assert jnp.allclose(z, ref_z, atol=1.5e-1, rtol=1.5e-1)

    print("KERNEL_OK")
</pallas_src>

<mosaic_0001>
module attributes {stable_mosaic.version = 11 : i64} {
  func.func @_vae_classifier_kernel(%arg0: i32, %arg1: memref<8x784xbf16, #tpu.memory_space<vmem>>, %arg2: memref<8x128xbf16, #tpu.memory_space<vmem>>, %arg3: memref<784x512xbf16, #tpu.memory_space<vmem>>, %arg4: memref<1x512xf32, #tpu.memory_space<vmem>>, %arg5: memref<512x256xbf16, #tpu.memory_space<vmem>>, %arg6: memref<1x256xf32, #tpu.memory_space<vmem>>, %arg7: memref<256x128xbf16, #tpu.memory_space<vmem>>, %arg8: memref<1x128xf32, #tpu.memory_space<vmem>>, %arg9: memref<128x128xbf16, #tpu.memory_space<vmem>>, %arg10: memref<1x128xf32, #tpu.memory_space<vmem>>, %arg11: memref<128x128xbf16, #tpu.memory_space<vmem>>, %arg12: memref<1x128xf32, #tpu.memory_space<vmem>>, %arg13: memref<8x128xf32, #tpu.memory_space<vmem>>) attributes {dimension_semantics = [#tpu.dimension_semantics<parallel>], iteration_bounds = array<i64: 1>, scalar_prefetch = 0 : i64, scratch_operands = 0 : i64, tpu.core_type = #tpu.core_type<tc>, window_params = [{transform_indices = @transform_0, window_bounds = array<i64: 8, 784>}, {transform_indices = @transform_1, window_bounds = array<i64: 8, 128>}, {pipeline_mode = #tpu.pipeline_mode<synchronous>, transform_indices = @transform_2, window_bounds = array<i64: 784, 512>}, {pipeline_mode = #tpu.pipeline_mode<synchronous>, transform_indices = @transform_3, window_bounds = array<i64: 1, 512>}, {pipeline_mode = #tpu.pipeline_mode<synchronous>, transform_indices = @transform_4, window_bounds = array<i64: 512, 256>}, {pipeline_mode = #tpu.pipeline_mode<synchronous>, transform_indices = @transform_5, window_bounds = array<i64: 1, 256>}, {pipeline_mode = #tpu.pipeline_mode<synchronous>, transform_indices = @transform_6, window_bounds = array<i64: 256, 128>}, {pipeline_mode = #tpu.pipeline_mode<synchronous>, transform_indices = @transform_7, window_bounds = array<i64: 1, 128>}, {pipeline_mode = #tpu.pipeline_mode<synchronous>, transform_indices = @transform_8, window_bounds = array<i64: 128, 128>}, {pipeline_mode = #tpu.pipeline_mode<synchronous>, transform_indices = @transform_9, window_bounds = array<i64: 1, 128>}, {pipeline_mode = #tpu.pipeline_mode<synchronous>, transform_indices = @transform_10, window_bounds = array<i64: 128, 128>}, {pipeline_mode = #tpu.pipeline_mode<synchronous>, transform_indices = @transform_11, window_bounds = array<i64: 1, 128>}, {transform_indices = @transform_12, window_bounds = array<i64: 8, 128>}]} {
    %c0 = arith.constant 0 : index
    %c0_0 = arith.constant 0 : index
    %0 = vector.load %arg1[%c0, %c0_0] : memref<8x784xbf16, #tpu.memory_space<vmem>>, vector<8x784xbf16>
    %c0_1 = arith.constant 0 : index
    %c0_2 = arith.constant 0 : index
    %1 = vector.load %arg3[%c0_1, %c0_2] : memref<784x512xbf16, #tpu.memory_space<vmem>>, vector<784x512xbf16>
    %cst = arith.constant dense<0.000000e+00> : vector<8x512xf32>
    %2 = tpu.matmul %0, %1, %cst {dimension_numbers = #tpu.dot_dimension_numbers<[1], [0], [0], [1], [0, 0, 1, 1], [], []>} : vector<8x784xbf16>, vector<784x512xbf16>, vector<8x512xf32> -> vector<8x512xf32>
    %c0_3 = arith.constant 0 : index
    %c0_4 = arith.constant 0 : index
    %3 = vector.load %arg4[%c0_3, %c0_4] : memref<1x512xf32, #tpu.memory_space<vmem>>, vector<1x512xf32>
    %4 = vector.broadcast %3 : vector<1x512xf32> to vector<8x512xf32>
    %5 = arith.addf %2, %4 : vector<8x512xf32>
    %cst_5 = arith.constant 0.000000e+00 : f32
    %6 = vector.broadcast %cst_5 : f32 to vector<8x512xf32>
    %7 = arith.maximumf %5, %6 : vector<8x512xf32>
    %8 = arith.truncf %7 : vector<8x512xf32> to vector<8x512xbf16>
    %c0_6 = arith.constant 0 : index
    %c0_7 = arith.constant 0 : index
    %9 = vector.load %arg5[%c0_6, %c0_7] : memref<512x256xbf16, #tpu.memory_space<vmem>>, vector<512x256xbf16>
    %cst_8 = arith.constant dense<0.000000e+00> : vector<8x256xf32>
    %10 = tpu.matmul %8, %9, %cst_8 {dimension_numbers = #tpu.dot_dimension_numbers<[1], [0], [0], [1], [0, 0, 1, 1], [], []>} : vector<8x512xbf16>, vector<512x256xbf16>, vector<8x256xf32> -> vector<8x256xf32>
    %c0_9 = arith.constant 0 : index
    %c0_10 = arith.constant 0 : index
    %11 = vector.load %arg6[%c0_9, %c0_10] : memref<1x256xf32, #tpu.memory_space<vmem>>, vector<1x256xf32>
    %12 = vector.broadcast %11 : vector<1x256xf32> to vector<8x256xf32>
    %13 = arith.addf %10, %12 : vector<8x256xf32>
    %cst_11 = arith.constant 0.000000e+00 : f32
    %14 = vector.broadcast %cst_11 : f32 to vector<8x256xf32>
    %15 = arith.maximumf %13, %14 : vector<8x256xf32>
    %16 = arith.truncf %15 : vector<8x256xf32> to vector<8x256xbf16>
    %c0_12 = arith.constant 0 : index
    %c0_13 = arith.constant 0 : index
    %17 = vector.load %arg7[%c0_12, %c0_13] : memref<256x128xbf16, #tpu.memory_space<vmem>>, vector<256x128xbf16>
    %cst_14 = arith.constant dense<0.000000e+00> : vector<8x128xf32>
    %18 = tpu.matmul %16, %17, %cst_14 {dimension_numbers = #tpu.dot_dimension_numbers<[1], [0], [0], [1], [0, 0, 1, 1], [], []>} : vector<8x256xbf16>, vector<256x128xbf16>, vector<8x128xf32> -> vector<8x128xf32>
    %c0_15 = arith.constant 0 : index
    %c0_16 = arith.constant 0 : index
    %19 = vector.load %arg8[%c0_15, %c0_16] : memref<1x128xf32, #tpu.memory_space<vmem>>, vector<1x128xf32>
    %20 = vector.broadcast %19 : vector<1x128xf32> to vector<8x128xf32>
    %21 = arith.addf %18, %20 : vector<8x128xf32>
    %22 = tpu.iota {dimensions = array<i32: 1>} : vector<8x128xi32>
    %c64_i32 = arith.constant 64 : i32
    %23 = tpu.dynamic_rotate %21 by %c64_i32 dim 1 : vector<8x128xf32>, i32 -> vector<8x128xf32>
    %c64_i32_17 = arith.constant 64 : i32
    %24 = vector.broadcast %c64_i32_17 : i32 to vector<8x128xi32>
    %25 = arith.cmpi slt, %22, %24 : vector<8x128xi32>
    %cst_18 = arith.constant 0.000000e+00 : f32
    %26 = vector.broadcast %cst_18 : f32 to vector<8x128xf32>
    %27 = arith.select %25, %23, %26 : vector<8x128xi1>, vector<8x128xf32>
    %cst_19 = arith.constant 5.000000e-01 : f32
    %28 = vector.broadcast %cst_19 : f32 to vector<8x128xf32>
    %29 = arith.mulf %28, %27 : vector<8x128xf32>
    %30 = math.exp %29 : vector<8x128xf32>
    %c0_20 = arith.constant 0 : index
    %c0_21 = arith.constant 0 : index
    %31 = vector.load %arg2[%c0_20, %c0_21] : memref<8x128xbf16, #tpu.memory_space<vmem>>, vector<8x128xbf16>
    %32 = arith.extf %31 : vector<8x128xbf16> to vector<8x128xf32>
    %33 = arith.mulf %32, %30 : vector<8x128xf32>
    %34 = arith.addf %21, %33 : vector<8x128xf32>
    %35 = arith.truncf %34 : vector<8x128xf32> to vector<8x128xbf16>
    %c0_22 = arith.constant 0 : index
    %c0_23 = arith.constant 0 : index
    %36 = vector.load %arg9[%c0_22, %c0_23] : memref<128x128xbf16, #tpu.memory_space<vmem>>, vector<128x128xbf16>
    %cst_24 = arith.constant dense<0.000000e+00> : vector<8x128xf32>
    %37 = tpu.matmul %35, %36, %cst_24 {dimension_numbers = #tpu.dot_dimension_numbers<[1], [0], [0], [1], [0, 0, 1, 1], [], []>} : vector<8x128xbf16>, vector<128x128xbf16>, vector<8x128xf32> -> vector<8x128xf32>
    %c0_25 = arith.constant 0 : index
    %c0_26 = arith.constant 0 : index
    %38 = vector.load %arg10[%c0_25, %c0_26] : memref<1x128xf32, #tpu.memory_space<vmem>>, vector<1x128xf32>
    %39 = vector.broadcast %38 : vector<1x128xf32> to vector<8x128xf32>
    %40 = arith.addf %37, %39 : vector<8x128xf32>
    %cst_27 = arith.constant 0.000000e+00 : f32
    %41 = vector.broadcast %cst_27 : f32 to vector<8x128xf32>
    %42 = arith.maximumf %40, %41 : vector<8x128xf32>
    %43 = arith.truncf %42 : vector<8x128xf32> to vector<8x128xbf16>
    %c0_28 = arith.constant 0 : index
    %c0_29 = arith.constant 0 : index
    %44 = vector.load %arg11[%c0_28, %c0_29] : memref<128x128xbf16, #tpu.memory_space<vmem>>, vector<128x128xbf16>
    %cst_30 = arith.constant dense<0.000000e+00> : vector<8x128xf32>
    %45 = tpu.matmul %43, %44, %cst_30 {dimension_numbers = #tpu.dot_dimension_numbers<[1], [0], [0], [1], [0, 0, 1, 1], [], []>} : vector<8x128xbf16>, vector<128x128xbf16>, vector<8x128xf32> -> vector<8x128xf32>
    %c0_31 = arith.constant 0 : index
    %c0_32 = arith.constant 0 : index
    %46 = vector.load %arg12[%c0_31, %c0_32] : memref<1x128xf32, #tpu.memory_space<vmem>>, vector<1x128xf32>
    %47 = vector.broadcast %46 : vector<1x128xf32> to vector<8x128xf32>
    %48 = arith.addf %45, %47 : vector<8x128xf32>
    %c64_i32_33 = arith.constant 64 : i32
    %49 = vector.broadcast %c64_i32_33 : i32 to vector<8x128xi32>
    %50 = arith.cmpi slt, %22, %49 : vector<8x128xi32>
    %51 = arith.select %50, %34, %48 : vector<8x128xi1>, vector<8x128xf32>
    %c0_34 = arith.constant 0 : index
    %c0_35 = arith.constant 0 : index
    %52 = vector.load %arg13[%c0_34, %c0_35] : memref<8x128xf32, #tpu.memory_space<vmem>>, vector<8x128xf32>
    tpu.vector_store %arg13[%c0_34, %c0_35], %51 {strides = array<i32>} : memref<8x128xf32, #tpu.memory_space<vmem>>, vector<8x128xf32>,
    return
  }
  func.func @transform_0(%arg0: i32) -> (i32, i32) {
    %c0_i32 = arith.constant 0 : i32
    %c0_i32_0 = arith.constant 0 : i32
    return %arg0, %c0_i32 : i32, i32
  }
  func.func @transform_1(%arg0: i32) -> (i32, i32) {
    %c0_i32 = arith.constant 0 : i32
    %c0_i32_0 = arith.constant 0 : i32
    return %arg0, %c0_i32 : i32, i32
  }
  func.func @transform_2(%arg0: i32) -> (i32, i32) {
    %c0_i32 = arith.constant 0 : i32
    %c0_i32_0 = arith.constant 0 : i32
    %c0_i32_1 = arith.constant 0 : i32
    return %c0_i32, %c0_i32_0 : i32, i32
  }
  func.func @transform_3(%arg0: i32) -> (i32, i32) {
    %c0_i32 = arith.constant 0 : i32
    %c0_i32_0 = arith.constant 0 : i32
    %c0_i32_1 = arith.constant 0 : i32
    return %c0_i32, %c0_i32_0 : i32, i32
  }
  func.func @transform_4(%arg0: i32) -> (i32, i32) {
    %c0_i32 = arith.constant 0 : i32
    %c0_i32_0 = arith.constant 0 : i32
    %c0_i32_1 = arith.constant 0 : i32
    return %c0_i32, %c0_i32_0 : i32, i32
  }
  func.func @transform_5(%arg0: i32) -> (i32, i32) {
    %c0_i32 = arith.constant 0 : i32
    %c0_i32_0 = arith.constant 0 : i32
    %c0_i32_1 = arith.constant 0 : i32
    return %c0_i32, %c0_i32_0 : i32, i32
  }
  func.func @transform_6(%arg0: i32) -> (i32, i32) {
    %c0_i32 = arith.constant 0 : i32
    %c0_i32_0 = arith.constant 0 : i32
    %c0_i32_1 = arith.constant 0 : i32
    return %c0_i32, %c0_i32_0 : i32, i32
  }
  func.func @transform_7(%arg0: i32) -> (i32, i32) {
    %c0_i32 = arith.constant 0 : i32
    %c0_i32_0 = arith.constant 0 : i32
    %c0_i32_1 = arith.constant 0 : i32
    return %c0_i32, %c0_i32_0 : i32, i32
  }
  func.func @transform_8(%arg0: i32) -> (i32, i32) {
    %c0_i32 = arith.constant 0 : i32
    %c0_i32_0 = arith.constant 0 : i32
    %c0_i32_1 = arith.constant 0 : i32
    return %c0_i32, %c0_i32_0 : i32, i32
  }
  func.func @transform_9(%arg0: i32) -> (i32, i32) {
    %c0_i32 = arith.constant 0 : i32
    %c0_i32_0 = arith.constant 0 : i32
    %c0_i32_1 = arith.constant 0 : i32
    return %c0_i32, %c0_i32_0 : i32, i32
  }
  func.func @transform_10(%arg0: i32) -> (i32, i32) {
    %c0_i32 = arith.constant 0 : i32
    %c0_i32_0 = arith.constant 0 : i32
    %c0_i32_1 = arith.constant 0 : i32
    return %c0_i32, %c0_i32_0 : i32, i32
  }
  func.func @transform_11(%arg0: i32) -> (i32, i32) {
    %c0_i32 = arith.constant 0 : i32
    %c0_i32_0 = arith.constant 0 : i32
    %c0_i32_1 = arith.constant 0 : i32
    return %c0_i32, %c0_i32_0 : i32, i32
  }
  func.func @transform_12(%arg0: i32) -> (i32, i32) {
    %c0_i32 = arith.constant 0 : i32
    %c0_i32_0 = arith.constant 0 : i32
    return %arg0, %c0_i32 : i32, i32
  }
}

</mosaic_0001>

<llo_original>
// kernel: tpu_custom_call.1
$region0: #{tpu_custom_call.1}
  #allocation0 [shape = 'u32[]', space=smem, size = 0x4, offset = 0x4, fixed_abs, tag = 'smem constant byte address 0x4 - core index']
  #allocation1 [shape = 'u32[144,128]{1,0:T(1,128)}', space=vmem, size = 0x12000, scoped, tag = 'internal scratch']
  %s0 = inlined_call_operand.hbm [shape: bf16[8,784], index: 0, kind: input, shape index: {}]
  %s1 = inlined_call_operand.hbm [shape: bf16[8,128], index: 1, kind: input, shape index: {}]
  %s2 = inlined_call_operand.hbm [shape: bf16[784,512], index: 2, kind: input, shape index: {}]
  %s3 = inlined_call_operand.vmem [shape: f32[1,512], index: 3, kind: input, shape index: {}]
  %s4 = inlined_call_operand.hbm [shape: bf16[512,256], index: 4, kind: input, shape index: {}]
  %s5 = inlined_call_operand.vmem [shape: f32[1,256], index: 5, kind: input, shape index: {}]
  %s6 = inlined_call_operand.hbm [shape: bf16[256,128], index: 6, kind: input, shape index: {}]
  %s7 = inlined_call_operand.vmem [shape: f32[1,128], index: 7, kind: input, shape index: {}]
  %s8 = inlined_call_operand.hbm [shape: bf16[128,128], index: 8, kind: input, shape index: {}]
  %s9 = inlined_call_operand.vmem [shape: f32[1,128], index: 9, kind: input, shape index: {}]
  %s10 = inlined_call_operand.hbm [shape: bf16[128,128], index: 10, kind: input, shape index: {}]
  %s11 = inlined_call_operand.vmem [shape: f32[1,128], index: 11, kind: input, shape index: {}]
  %s12 = inlined_call_operand.hbm [shape: f32[8,128], index: 12, kind: output, shape index: {}]
  %s13 = sld [smem:[#allocation0]]
  $region86: #{tpu_custom_call.1} parent=0
    _
  %s15 = ssub.s32 1, %s13
  %s16 = scalar_select 0, %s15, %s13
  $region1: #{tpu_custom_call.1} parent=0
    #allocation2 [shape = 'u8[14336]{0}', space=vmem, size = 0x3800, scoped, tag = 'input window, operand 0, single buffered']
    #allocation3 [shape = 's32[1]{0}', space=sflag, size = 0x4, scoped, tag = 'scoped memory for tpu_custom_call.1']
    #allocation4 [shape = 's32[1]{0}', space=sflag, size = 0x4, scoped, tag = 'scoped memory for tpu_custom_call.1']
    #allocation5 [shape = 'u8[2048]{0}', space=vmem, size = 0x800, scoped, tag = 'input window, operand 1, single buffered']
    #allocation6 [shape = 's32[1]{0}', space=sflag, size = 0x4, scoped, tag = 'scoped memory for tpu_custom_call.1']
    #allocation7 [shape = 'u8[802816]{0}', space=vmem, size = 0xc4000, scoped, tag = 'input window, operand 2, single buffered']
    #allocation8 [shape = 'u8[262144]{0}', space=vmem, size = 0x40000, scoped, tag = 'input window, operand 4, single buffered']
    #allocation9 [shape = 's32[1]{0}', space=sflag, size = 0x4, scoped, tag = 'scoped memory for tpu_custom_call.1']
    #allocation10 [shape = 'u8[65536]{0}', space=vmem, size = 0x10000, scoped, tag = 'input window, operand 6, single buffered']
    #allocation11 [shape = 'u8[32768]{0}', space=vmem, size = 0x8000, scoped, tag = 'input window, operand 8, single buffered']
    #allocation12 [shape = 's32[1]{0}', space=sflag, size = 0x4, scoped, tag = 'scoped memory for tpu_custom_call.1']
    #allocation13 [shape = 'u8[32768]{0}', space=vmem, size = 0x8000, scoped, tag = 'input window, operand 10, single buffered']
    #allocation14 [shape = 'u8[4096]{0}', space=vmem, size = 0x1000, scoped, tag = 'output window, operand 0, single buffered']
    %17 = vsyncpa [#allocation3], 0
    %18 = vsyncpa [#allocation6], 0
    %19 = vsyncpa [#allocation9], 0
    %20 = vsyncpa [#allocation12], 0
    %21 = vsyncpa [#allocation4], 0
    // Predicated region
    $region2: #{tpu_custom_call.1} parent=1 // pred_check
      _
    $region3: #{tpu_custom_call.1} parent=1 // pred_check_branch
      %23 = sbr.rel (0) target = $region5
    $region4: #{tpu_custom_call.1} parent=1 // pred_region
      %s25 = ssub.s32 448, 448
      %26 = vsyncadd [#allocation3], %s25
      %s28 = sshll.u32 [#allocation2], 4
      %s29 = int_to_ptr.vmem [resolvable:$true] %s28
      %31 = dma.hbm_to_vmem [thread:$0]  %s0, 448, %s29, [#allocation3]
    $region5: #{tpu_custom_call.1} parent=1 // pred_fallthru
      _
    // Predicated region
    $region6: #{tpu_custom_call.1} parent=1 // pred_check
      _
    $region7: #{tpu_custom_call.1} parent=1 // pred_check_branch
      %33 = sbr.rel (0) target = $region9
    $region8: #{tpu_custom_call.1} parent=1 // pred_region
      %s35 = ssub.s32 64, 64
      %36 = vsyncadd [#allocation6], %s35
      %s38 = sshll.u32 [#allocation5], 4
      %s39 = int_to_ptr.vmem [resolvable:$true] %s38
      %41 = dma.hbm_to_vmem [thread:$0]  %s1, 64, %s39, [#allocation6]
    $region9: #{tpu_custom_call.1} parent=1 // pred_fallthru
      _
    // Predicated region
    $region10: #{tpu_custom_call.1} parent=1 // pred_check
      _
    $region11: #{tpu_custom_call.1} parent=1 // pred_check_branch
      %43 = sbr.rel (0) target = $region13
    $region12: #{tpu_custom_call.1} parent=1 // pred_region
      %s45 = ssub.s32 25088, 25088
      %46 = vsyncadd [#allocation6], %s45
      %s47 = sshll.u32 [#allocation7], 4
      %s48 = int_to_ptr.vmem [resolvable:$true] %s47
      %53 = dma.hbm_to_vmem [thread:$0]  %s2, 25088, %s48, [#allocation6], 256, 256, 16
    $region13: #{tpu_custom_call.1} parent=1 // pred_fallthru
      _
    // Predicated region
    $region14: #{tpu_custom_call.1} parent=1 // pred_check
      _
    $region15: #{tpu_custom_call.1} parent=1 // pred_check_branch
      %55 = sbr.rel (0) target = $region17
    $region16: #{tpu_custom_call.1} parent=1 // pred_region
      _
    $region17: #{tpu_custom_call.1} parent=1 // pred_fallthru
      _
    // Predicated region
    $region18: #{tpu_custom_call.1} parent=1 // pred_check
      _
    $region19: #{tpu_custom_call.1} parent=1 // pred_check_branch
      %57 = sbr.rel (0) target = $region21
    $region20: #{tpu_custom_call.1} parent=1 // pred_region
      %s59 = ssub.s32 8192, 8192
      %60 = vsyncadd [#allocation9], %s59
      %s61 = sshll.u32 [#allocation8], 4
      %s62 = int_to_ptr.vmem [resolvable:$true] %s61
      %67 = dma.hbm_to_vmem [thread:$0]  %s4, 8192, %s62, [#allocation9], 128, 128, 8
    $region21: #{tpu_custom_call.1} parent=1 // pred_fallthru
      _
    // Predicated region
    $region22: #{tpu_custom_call.1} parent=1 // pred_check
      _
    $region23: #{tpu_custom_call.1} parent=1 // pred_check_branch
      %69 = sbr.rel (0) target = $region25
    $region24: #{tpu_custom_call.1} parent=1 // pred_region
      _
    $region25: #{tpu_custom_call.1} parent=1 // pred_fallthru
      _
    // Predicated region
    $region26: #{tpu_custom_call.1} parent=1 // pred_check
      _
    $region27: #{tpu_custom_call.1} parent=1 // pred_check_branch
      %71 = sbr.rel (0) target = $region29
    $region28: #{tpu_custom_call.1} parent=1 // pred_region
      %s73 = ssub.s32 2048, 2048
      %74 = vsyncadd [#allocation9], %s73
      %s75 = sshll.u32 [#allocation10], 4
      %s76 = int_to_ptr.vmem [resolvable:$true] %s75
      %81 = dma.hbm_to_vmem [thread:$0]  %s6, 2048, %s76, [#allocation9], 64, 64, 4
    $region29: #{tpu_custom_call.1} parent=1 // pred_fallthru
      _
    // Predicated region
    $region30: #{tpu_custom_call.1} parent=1 // pred_check
      _
    $region31: #{tpu_custom_call.1} parent=1 // pred_check_branch
      %83 = sbr.rel (0) target = $region33
    $region32: #{tpu_custom_call.1} parent=1 // pred_region
      _
    $region33: #{tpu_custom_call.1} parent=1 // pred_fallthru
      _
    // Predicated region
    $region34: #{tpu_custom_call.1} parent=1 // pred_check
      _
    $region35: #{tpu_custom_call.1} parent=1 // pred_check_branch
      %85 = sbr.rel (0) target = $region37
    $region36: #{tpu_custom_call.1} parent=1 // pred_region
      %s87 = ssub.s32 1024, 1024
      %88 = vsyncadd [#allocation12], %s87
      %s89 = sshll.u32 [#allocation11], 4
      %s90 = int_to_ptr.vmem [resolvable:$true] %s89
      %95 = dma.hbm_to_vmem [thread:$0]  %s8, 1024, %s90, [#allocation12], 64, 64, 4
    $region37: #{tpu_custom_call.1} parent=1 // pred_fallthru
      _
    // Predicated region
    $region38: #{tpu_custom_call.1} parent=1 // pred_check
      _
    $region39: #{tpu_custom_call.1} parent=1 // pred_check_branch
      %97 = sbr.rel (0) target = $region41
    $region40: #{tpu_custom_call.1} parent=1 // pred_region
      _
    $region41: #{tpu_custom_call.1} parent=1 // pred_fallthru
      _
    // Predicated region
    $region42: #{tpu_custom_call.1} parent=1 // pred_check
      _
    $region43: #{tpu_custom_call.1} parent=1 // pred_check_branch
      %99 = sbr.rel (0) target = $region45
    $region44: #{tpu_custom_call.1} parent=1 // pred_region
      %s101 = ssub.s32 1024, 1024
      %102 = vsyncadd [#allocation12], %s101
      %s103 = sshll.u32 [#allocation13], 4
      %s104 = int_to_ptr.vmem [resolvable:$true] %s103
      %109 = dma.hbm_to_vmem [thread:$0]  %s10, 1024, %s104, [#allocation12], 64, 64, 4
    $region45: #{tpu_custom_call.1} parent=1 // pred_fallthru
      _
    // Predicated region
    $region46: #{tpu_custom_call.1} parent=1 // pred_check
      _
    $region47: #{tpu_custom_call.1} parent=1 // pred_check_branch
      %111 = sbr.rel (0) target = $region49
    $region48: #{tpu_custom_call.1} parent=1 // pred_region
      _
    $region49: #{tpu_custom_call.1} parent=1 // pred_fallthru
      _
    // Predicated region
    $region50: #{tpu_custom_call.1} parent=1 // pred_check
      _
    $region51: #{tpu_custom_call.1} parent=1 // pred_check_branch
      %113 = sbr.rel (0) target = $region53
    $region52: #{tpu_custom_call.1} parent=1 // pred_region
      %114 = dma.done [#allocation3], 448
    $region53: #{tpu_custom_call.1} parent=1 // pred_fallthru
      _
    // Predicated region
    $region54: #{tpu_custom_call.1} parent=1 // pred_check
      _
    $region55: #{tpu_custom_call.1} parent=1 // pred_check_branch
      %116 = sbr.rel (0) target = $region57
    $region56: #{tpu_custom_call.1} parent=1 // pred_region
      %117 = dma.done [#allocation6], 64
    $region57: #{tpu_custom_call.1} parent=1 // pred_fallthru
      _
    // Predicated region
    $region58: #{tpu_custom_call.1} parent=1 // pred_check
      _
    $region59: #{tpu_custom_call.1} parent=1 // pred_check_branch
      %119 = sbr.rel (0) target = $region61
    $region60: #{tpu_custom_call.1} parent=1 // pred_region
      %120 = dma.done [#allocation6], 25088
    $region61: #{tpu_custom_call.1} parent=1 // pred_fallthru
      _
    // Predicated region
    $region62: #{tpu_custom_call.1} parent=1 // pred_check
      _
    $region63: #{tpu_custom_call.1} parent=1 // pred_check_branch
      %122 = sbr.rel (0) target = $region65
    $region64: #{tpu_custom_call.1} parent=1 // pred_region
      %123 = dma.done [#allocation9], 8192
    $region65: #{tpu_custom_call.1} parent=1 // pred_fallthru
      _
    // Predicated region
    $region66: #{tpu_custom_call.1} parent=1 // pred_check
      _
    $region67: #{tpu_custom_call.1} parent=1 // pred_check_branch
      %125 = sbr.rel (0) target = $region69
    $region68: #{tpu_custom_call.1} parent=1 // pred_region
      %126 = dma.done [#allocation9], 2048
    $region69: #{tpu_custom_call.1} parent=1 // pred_fallthru
      _
    // Predicated region
    $region70: #{tpu_custom_call.1} parent=1 // pred_check
      _
    $region71: #{tpu_custom_call.1} parent=1 // pred_check_branch
      %128 = sbr.rel (0) target = $region73
    $region72: #{tpu_custom_call.1} parent=1 // pred_region
      %129 = dma.done [#allocation12], 1024
    $region73: #{tpu_custom_call.1} parent=1 // pred_fallthru
      _
    // Predicated region
    $region74: #{tpu_custom_call.1} parent=1 // pred_check
      _
    $region75: #{tpu_custom_call.1} parent=1 // pred_check_branch
      %131 = sbr.rel (0) target = $region77
    $region76: #{tpu_custom_call.1} parent=1 // pred_region
      %132 = dma.done [#allocation12], 1024
    $region77: #{tpu_custom_call.1} parent=1 // pred_fallthru
      _
    %v134 = vld [vmem:[#allocation2] sm:$0xff]
    %v135 = vld [vmem:[#allocation2 + $0x8] sm:$0xff]
    %v136 = vld [vmem:[#allocation2 + $0x10] sm:$0xff]
    %v137 = vld [vmem:[#allocation2 + $0x18] sm:$0xf]
    %v138 = vld [vmem:[#allocation7] sm:$0xff]
    %v139 = vld [vmem:[#allocation7 + $0x8] sm:$0xff]
    %v140 = vld [vmem:[#allocation7 + $0x10] sm:$0xff]
    %v141 = vld [vmem:[#allocation7 + $0x18] sm:$0xff]
    %v142 = vld [vmem:[#allocation7 + $0x20] sm:$0xff]
    %v143 = vld [vmem:[#allocation7 + $0x28] sm:$0xff]
    %v144 = vld [vmem:[#allocation7 + $0x30] sm:$0xff]
    %v145 = vld [vmem:[#allocation7 + $0x38] sm:$0xff]
    %v146 = vld [vmem:[#allocation7 + $0x40] sm:$0xff]
    %v147 = vld [vmem:[#allocation7 + $0x48] sm:$0xff]
    %v148 = vld [vmem:[#allocation7 + $0x50] sm:$0xff]
    %v149 = vld [vmem:[#allocation7 + $0x58] sm:$0xff]
    %v150 = vld [vmem:[#allocation7 + $0x60] sm:$0xff]
    %v151 = vld [vmem:[#allocation7 + $0x68] sm:$0xff]
    %v152 = vld [vmem:[#allocation7 + $0x70] sm:$0xff]
    %v153 = vld [vmem:[#allocation7 + $0x78] sm:$0xff]
    %v154 = vld [vmem:[#allocation7 + $0x80] sm:$0xff]
    %v155 = vld [vmem:[#allocation7 + $0x88] sm:$0xff]
    %v156 = vld [vmem:[#allocation7 + $0x90] sm:$0xff]
    %v157 = vld [vmem:[#allocation7 + $0x98] sm:$0xff]
    %v158 = vld [vmem:[#allocation7 + $0xa0] sm:$0xff]
    %v159 = vld [vmem:[#allocation7 + $0xa8] sm:$0xff]
    %v160 = vld [vmem:[#allocation7 + $0xb0] sm:$0xff]
    %v161 = vld [vmem:[#allocation7 + $0xb8] sm:$0xff]
    %v162 = vld [vmem:[#allocation7 + $0xc0] sm:$0xff]
    %v163 = vld [vmem:[#allocation7 + $0xc8] sm:$0xff]
    %v164 = vld [vmem:[#allocation7 + $0xd0] sm:$0xff]
    %v165 = vld [vmem:[#allocation7 + $0xd8] sm:$0xff]
    %v166 = vld [vmem:[#allocation7 + $0xe0] sm:$0xff]
    %v167 = vld [vmem:[#allocation7 + $0xe8] sm:$0xff]
    %v168 = vld [vmem:[#allocation7 + $0xf0] sm:$0xff]
    %v169 = vld [vmem:[#allocation7 + $0xf8] sm:$0xff]
    %v170 = vld [vmem:[#allocation7 + $0x100] sm:$0xff]
    %v171 = vld [vmem:[#allocation7 + $0x108] sm:$0xff]
    %v172 = vld [vmem:[#allocation7 + $0x110] sm:$0xff]
    %v173 = vld [vmem:[#allocation7 + $0x118] sm:$0xff]
    %v174 = vld [vmem:[#allocation7 + $0x120] sm:$0xff]
    %v175 = vld [vmem:[#allocation7 + $0x128] sm:$0xff]
    %v176 = vld [vmem:[#allocation7 + $0x130] sm:$0xff]
    %v177 = vld [vmem:[#allocation7 + $0x138] sm:$0xff]
    %v178 = vld [vmem:[#allocation7 + $0x140] sm:$0xff]
    %v179 = vld [vmem:[#allocation7 + $0x148] sm:$0xff]
    %v180 = vld [vmem:[#allocation7 + $0x150] sm:$0xff]
    %v181 = vld [vmem:[#allocation7 + $0x158] sm:$0xff]
    %v182 = vld [vmem:[#allocation7 + $0x160] sm:$0xff]
    %v183 = vld [vmem:[#allocation7 + $0x168] sm:$0xff]
    %v184 = vld [vmem:[#allocation7 + $0x170] sm:$0xff]
    %v185 = vld [vmem:[#allocation7 + $0x178] sm:$0xff]
    %v186 = vld [vmem:[#allocation7 + $0x180] sm:$0xff]
    %v187 = vld [vmem:[#allocation7 + $0x188] sm:$0xff]
    %v188 = vld [vmem:[#allocation7 + $0x190] sm:$0xff]
    %v189 = vld [vmem:[#allocation7 + $0x198] sm:$0xff]
    %v190 = vld [vmem:[#allocation7 + $0x1a0] sm:$0xff]
    %v191 = vld [vmem:[#allocation7 + $0x1a8] sm:$0xff]
    %v192 = vld [vmem:[#allocation7 + $0x1b0] sm:$0xff]
    %v193 = vld [vmem:[#allocation7 + $0x1b8] sm:$0xff]
    %v194 = vld [vmem:[#allocation7 + $0x1c0] sm:$0xff]
    %v195 = vld [vmem:[#allocation7 + $0x1c8] sm:$0xff]
    %v196 = vld [vmem:[#allocation7 + $0x1d0] sm:$0xff]
    %v197 = vld [vmem:[#allocation7 + $0x1d8] sm:$0xff]
    %v198 = vld [vmem:[#allocation7 + $0x1e0] sm:$0xff]
    %v199 = vld [vmem:[#allocation7 + $0x1e8] sm:$0xff]
    %v200 = vld [vmem:[#allocation7 + $0x1f0] sm:$0xff]
    %v201 = vld [vmem:[#allocation7 + $0x1f8] sm:$0xff]
    %v202 = vld [vmem:[#allocation7 + $0x200] sm:$0xff]
    %v203 = vld [vmem:[#allocation7 + $0x208] sm:$0xff]
    %v204 = vld [vmem:[#allocation7 + $0x210] sm:$0xff]
    %v205 = vld [vmem:[#allocation7 + $0x218] sm:$0xff]
    %v206 = vld [vmem:[#allocation7 + $0x220] sm:$0xff]
    %v207 = vld [vmem:[#allocation7 + $0x228] sm:$0xff]
    %v208 = vld [vmem:[#allocation7 + $0x230] sm:$0xff]
    %v209 = vld [vmem:[#allocation7 + $0x238] sm:$0xff]
    %v210 = vld [vmem:[#allocation7 + $0x240] sm:$0xff]
    %v211 = vld [vmem:[#allocation7 + $0x248] sm:$0xff]
    %v212 = vld [vmem:[#allocation7 + $0x250] sm:$0xff]
    %v213 = vld [vmem:[#allocation7 + $0x258] sm:$0xff]
    %v214 = vld [vmem:[#allocation7 + $0x260] sm:$0xff]
    %v215 = vld [vmem:[#allocation7 + $0x268] sm:$0xff]
    %v216 = vld [vmem:[#allocation7 + $0x270] sm:$0xff]
    %v217 = vld [vmem:[#allocation7 + $0x278] sm:$0xff]
    %v218 = vld [vmem:[#allocation7 + $0x280] sm:$0xff]
    %v219 = vld [vmem:[#allocation7 + $0x288] sm:$0xff]
    %v220 = vld [vmem:[#allocation7 + $0x290] sm:$0xff]
    %v221 = vld [vmem:[#allocation7 + $0x298] sm:$0xff]
    %v222 = vld [vmem:[#allocation7 + $0x2a0] sm:$0xff]
    %v223 = vld [vmem:[#allocation7 + $0x2a8] sm:$0xff]
    %v224 = vld [vmem:[#allocation7 + $0x2b0] sm:$0xff]
    %v225 = vld [vmem:[#allocation7 + $0x2b8] sm:$0xff]
    %v226 = vld [vmem:[#allocation7 + $0x2c0] sm:$0xff]
    %v227 = vld [vmem:[#allocation7 + $0x2c8] sm:$0xff]
    %v228 = vld [vmem:[#allocation7 + $0x2d0] sm:$0xff]
    %v229 = vld [vmem:[#allocation7 + $0x2d8] sm:$0xff]
    %v230 = vld [vmem:[#allocation7 + $0x2e0] sm:$0xff]
    %v231 = vld [vmem:[#allocation7 + $0x2e8] sm:$0xff]
    %v232 = vld [vmem:[#allocation7 + $0x2f0] sm:$0xff]
    %v233 = vld [vmem:[#allocation7 + $0x2f8] sm:$0xff]
    %v234 = vld [vmem:[#allocation7 + $0x300] sm:$0xff]
    %v235 = vld [vmem:[#allocation7 + $0x308] sm:$0xff]
    %v236 = vld [vmem:[#allocation7 + $0x310] sm:$0xff]
    %v237 = vld [vmem:[#allocation7 + $0x318] sm:$0xff]
    %v238 = vld [vmem:[#allocation7 + $0x320] sm:$0xff]
    %v239 = vld [vmem:[#allocation7 + $0x328] sm:$0xff]
    %v240 = vld [vmem:[#allocation7 + $0x330] sm:$0xff]
    %v241 = vld [vmem:[#allocation7 + $0x338] sm:$0xff]
    %v242 = vld [vmem:[#allocation7 + $0x340] sm:$0xff]
    %v243 = vld [vmem:[#allocation7 + $0x348] sm:$0xff]
    %v244 = vld [vmem:[#allocation7 + $0x350] sm:$0xff]
    %v245 = vld [vmem:[#allocation7 + $0x358] sm:$0xff]
    %v246 = vld [vmem:[#allocation7 + $0x360] sm:$0xff]
    %v247 = vld [vmem:[#allocation7 + $0x368] sm:$0xff]
    %v248 = vld [vmem:[#allocation7 + $0x370] sm:$0xff]
    %v249 = vld [vmem:[#allocation7 + $0x378] sm:$0xff]
    %v250 = vld [vmem:[#allocation7 + $0x380] sm:$0xff]
    %v251 = vld [vmem:[#allocation7 + $0x388] sm:$0xff]
    %v252 = vld [vmem:[#allocation7 + $0x390] sm:$0xff]
    %v253 = vld [vmem:[#allocation7 + $0x398] sm:$0xff]
    %v254 = vld [vmem:[#allocation7 + $0x3a0] sm:$0xff]
    %v255 = vld [vmem:[#allocation7 + $0x3a8] sm:$0xff]
    %v256 = vld [vmem:[#allocation7 + $0x3b0] sm:$0xff]
    %v257 = vld [vmem:[#allocation7 + $0x3b8] sm:$0xff]
    %v258 = vld [vmem:[#allocation7 + $0x3c0] sm:$0xff]
    %v259 = vld [vmem:[#allocation7 + $0x3c8] sm:$0xff]
    %v260 = vld [vmem:[#allocation7 + $0x3d0] sm:$0xff]
    %v261 = vld [vmem:[#allocation7 + $0x3d8] sm:$0xff]
    %v262 = vld [vmem:[#allocation7 + $0x3e0] sm:$0xff]
    %v263 = vld [vmem:[#allocation7 + $0x3e8] sm:$0xff]
    %v264 = vld [vmem:[#allocation7 + $0x3f0] sm:$0xff]
    %v265 = vld [vmem:[#allocation7 + $0x3f8] sm:$0xff]
    %v266 = vld [vmem:[#allocation7 + $0x400] sm:$0xff]
    %v267 = vld [vmem:[#allocation7 + $0x408] sm:$0xff]
    %v268 = vld [vmem:[#allocation7 + $0x410] sm:$0xff]
    %v269 = vld [vmem:[#allocation7 + $0x418] sm:$0xff]
    %v270 = vld [vmem:[#allocation7 + $0x420] sm:$0xff]
    %v271 = vld [vmem:[#allocation7 + $0x428] sm:$0xff]
    %v272 = vld [vmem:[#allocation7 + $0x430] sm:$0xff]
    %v273 = vld [vmem:[#allocation7 + $0x438] sm:$0xff]
    %v274 = vld [vmem:[#allocation7 + $0x440] sm:$0xff]
    %v275 = vld [vmem:[#allocation7 + $0x448] sm:$0xff]
    %v276 = vld [vmem:[#allocation7 + $0x450] sm:$0xff]
    %v277 = vld [vmem:[#allocation7 + $0x458] sm:$0xff]
    %v278 = vld [vmem:[#allocation7 + $0x460] sm:$0xff]
    %v279 = vld [vmem:[#allocation7 + $0x468] sm:$0xff]
    %v280 = vld [vmem:[#allocation7 + $0x470] sm:$0xff]
    %v281 = vld [vmem:[#allocation7 + $0x478] sm:$0xff]
    %v282 = vld [vmem:[#allocation7 + $0x480] sm:$0xff]
    %v283 = vld [vmem:[#allocation7 + $0x488] sm:$0xff]
    %v284 = vld [vmem:[#allocation7 + $0x490] sm:$0xff]
    %v285 = vld [vmem:[#allocation7 + $0x498] sm:$0xff]
    %v286 = vld [vmem:[#allocation7 + $0x4a0] sm:$0xff]
    %v287 = vld [vmem:[#allocation7 + $0x4a8] sm:$0xff]
    %v288 = vld [vmem:[#allocation7 + $0x4b0] sm:$0xff]
    %v289 = vld [vmem:[#allocation7 + $0x4b8] sm:$0xff]
    %v290 = vld [vmem:[#allocation7 + $0x4c0] sm:$0xff]
    %v291 = vld [vmem:[#allocation7 + $0x4c8] sm:$0xff]
    %v292 = vld [vmem:[#allocation7 + $0x4d0] sm:$0xff]
    %v293 = vld [vmem:[#allocation7 + $0x4d8] sm:$0xff]
    %v294 = vld [vmem:[#allocation7 + $0x4e0] sm:$0xff]
    %v295 = vld [vmem:[#allocation7 + $0x4e8] sm:$0xff]
    %v296 = vld [vmem:[#allocation7 + $0x4f0] sm:$0xff]
    %v297 = vld [vmem:[#allocation7 + $0x4f8] sm:$0xff]
    %v298 = vld [vmem:[#allocation7 + $0x500] sm:$0xff]
    %v299 = vld [vmem:[#allocation7 + $0x508] sm:$0xff]
    %v300 = vld [vmem:[#allocation7 + $0x510] sm:$0xff]
    %v301 = vld [vmem:[#allocation7 + $0x518] sm:$0xff]
    %v302 = vld [vmem:[#allocation7 + $0x520] sm:$0xff]
    %v303 = vld [vmem:[#allocation7 + $0x528] sm:$0xff]
    %v304 = vld [vmem:[#allocation7 + $0x530] sm:$0xff]
    %v305 = vld [vmem:[#allocation7 + $0x538] sm:$0xff]
    %v306 = vld [vmem:[#allocation7 + $0x540] sm:$0xff]
    %v307 = vld [vmem:[#allocation7 + $0x548] sm:$0xff]
    %v308 = vld [vmem:[#allocation7 + $0x550] sm:$0xff]
    %v309 = vld [vmem:[#allocation7 + $0x558] sm:$0xff]
    %v310 = vld [vmem:[#allocation7 + $0x560] sm:$0xff]
    %v311 = vld [vmem:[#allocation7 + $0x568] sm:$0xff]
    %v312 = vld [vmem:[#allocation7 + $0x570] sm:$0xff]
    %v313 = vld [vmem:[#allocation7 + $0x578] sm:$0xff]
    %v314 = vld [vmem:[#allocation7 + $0x580] sm:$0xff]
    %v315 = vld [vmem:[#allocation7 + $0x588] sm:$0xff]
    %v316 = vld [vmem:[#allocation7 + $0x590] sm:$0xff]
    %v317 = vld [vmem:[#allocation7 + $0x598] sm:$0xff]
    %v318 = vld [vmem:[#allocation7 + $0x5a0] sm:$0xff]
    %v319 = vld [vmem:[#allocation7 + $0x5a8] sm:$0xff]
    %v320 = vld [vmem:[#allocation7 + $0x5b0] sm:$0xff]
    %v321 = vld [vmem:[#allocation7 + $0x5b8] sm:$0xff]
    %v322 = vld [vmem:[#allocation7 + $0x5c0] sm:$0xff]
    %v323 = vld [vmem:[#allocation7 + $0x5c8] sm:$0xff]
    %v324 = vld [vmem:[#allocation7 + $0x5d0] sm:$0xff]
    %v325 = vld [vmem:[#allocation7 + $0x5d8] sm:$0xff]
    %v326 = vld [vmem:[#allocation7 + $0x5e0] sm:$0xff]
    %v327 = vld [vmem:[#allocation7 + $0x5e8] sm:$0xff]
    %v328 = vld [vmem:[#allocation7 + $0x5f0] sm:$0xff]
    %v329 = vld [vmem:[#allocation7 + $0x5f8] sm:$0xff]
    %v330 = vld [vmem:[#allocation7 + $0x600] sm:$0xff]
    %v331 = vld [vmem:[#allocation7 + $0x608] sm:$0xff]
    %v332 = vld [vmem:[#allocation7 + $0x610] sm:$0xff]
    %v333 = vld [vmem:[#allocation7 + $0x618] sm:$0xff]
    %v334 = vld [vmem:[%s3] sm:$0xf]
    %v336 = vlaneseq
    %v337 = vshrl.u32 %v336, 7
    %v338 = vsub.s32 0, %v337
    %v339 = vrot.slane %v334, %v338
    %v340 = vlaneseq
    %v341 = vshrl.u32 %v340, 7
    %v342 = vsub.s32 1, %v341
    %v343 = vrot.slane %v334, %v342
    %v344 = vlaneseq
    %v345 = vshrl.u32 %v344, 7
    %v346 = vsub.s32 2, %v345
    %v347 = vrot.slane %v334, %v346
    %v348 = vlaneseq
    %v349 = vshrl.u32 %v348, 7
    %v350 = vsub.s32 3, %v349
    %v351 = vrot.slane %v334, %v350
    %v360 = vunpack.c.l.b16 %v134
    %v361 = vunpack.c.h.b16 %v134
    %v362 = vunpack.c.l.b16 %v135
    %v363 = vunpack.c.h.b16 %v135
    %v364 = vunpack.c.l.b16 %v136
    %v365 = vunpack.c.h.b16 %v136
    %v366 = vunpack.c.l.b16 %v137
    %v367 = vpack.c.b16 %v360, %v360
    %v368 = vpack.c.b16 %v361, %v361
    %v369 = vpack.c.b16 %v362, %v362
    %v370 = vpack.c.b16 %v363, %v363
    %v371 = vpack.c.b16 %v364, %v364
    %v372 = vpack.c.b16 %v365, %v365
    %v373 = vpack.c.b16 %v366, %v366
    %v576 = vunpack.c.l.b16 %v138
    %v577 = vunpack.c.h.b16 %v138
    %v578 = vunpack.c.l.b16 %v139
    %v579 = vunpack.c.h.b16 %v139
    %v580 = vunpack.c.l.b16 %v140
    %v581 = vunpack.c.h.b16 %v140
    %v582 = vunpack.c.l.b16 %v141
    %v583 = vunpack.c.h.b16 %v141
    %v584 = vunpack.c.l.b16 %v142
    %v585 = vunpack.c.h.b16 %v142
    %v586 = vunpack.c.l.b16 %v143
    %v587 = vunpack.c.h.b16 %v143
    %v588 = vunpack.c.l.b16 %v144
    %v589 = vunpack.c.h.b16 %v144
    %v590 = vunpack.c.l.b16 %v145
    %v591 = vunpack.c.h.b16 %v145
    %v592 = vunpack.c.l.b16 %v146
    %v593 = vunpack.c.h.b16 %v146
    %v594 = vunpack.c.l.b16 %v147
    %v595 = vunpack.c.h.b16 %v147
    %v596 = vunpack.c.l.b16 %v148
    %v597 = vunpack.c.h.b16 %v148
    %v598 = vunpack.c.l.b16 %v149
    %v599 = vunpack.c.h.b16 %v149
    %v600 = vunpack.c.l.b16 %v150
    %v601 = vunpack.c.h.b16 %v150
    %v602 = vunpack.c.l.b16 %v151
    %v603 = vunpack.c.h.b16 %v151
    %v604 = vunpack.c.l.b16 %v152
    %v605 = vunpack.c.h.b16 %v152
    %v606 = vunpack.c.l.b16 %v153
    %v607 = vunpack.c.h.b16 %v153
    %v608 = vunpack.c.l.b16 %v154
    %v609 = vunpack.c.h.b16 %v154
    %v610 = vunpack.c.l.b16 %v155
    %v611 = vunpack.c.h.b16 %v155
    %v612 = vunpack.c.l.b16 %v156
    %v613 = vunpack.c.h.b16 %v156
    %v614 = vunpack.c.l.b16 %v157
    %v615 = vunpack.c.h.b16 %v157
    %v616 = vunpack.c.l.b16 %v158
    %v617 = vunpack.c.h.b16 %v158
    %v618 = vunpack.c.l.b16 %v159
    %v619 = vunpack.c.h.b16 %v159
    %v620 = vunpack.c.l.b16 %v160
    %v621 = vunpack.c.h.b16 %v160
    %v622 = vunpack.c.l.b16 %v161
    %v623 = vunpack.c.h.b16 %v161
    %v624 = vunpack.c.l.b16 %v162
    %v625 = vunpack.c.h.b16 %v162
    %v626 = vunpack.c.l.b16 %v163
    %v627 = vunpack.c.h.b16 %v163
    %v628 = vunpack.c.l.b16 %v164
    %v629 = vunpack.c.h.b16 %v164
    %v630 = vunpack.c.l.b16 %v165
    %v631 = vunpack.c.h.b16 %v165
    %v632 = vunpack.c.l.b16 %v166
    %v633 = vunpack.c.h.b16 %v166
    %v634 = vunpack.c.l.b16 %v167
    %v635 = vunpack.c.h.b16 %v167
    %v636 = vunpack.c.l.b16 %v168
    %v637 = vunpack.c.h.b16 %v168
    %v638 = vunpack.c.l.b16 %v169
    %v639 = vunpack.c.h.b16 %v169
    %v640 = vunpack.c.l.b16 %v170
    %v641 = vunpack.c.h.b16 %v170
    %v642 = vunpack.c.l.b16 %v171
    %v643 = vunpack.c.h.b16 %v171
    %v644 = vunpack.c.l.b16 %v172
    %v645 = vunpack.c.h.b16 %v172
    %v646 = vunpack.c.l.b16 %v173
    %v647 = vunpack.c.h.b16 %v173
    %v648 = vunpack.c.l.b16 %v174
    %v649 = vunpack.c.h.b16 %v174
    %v650 = vunpack.c.l.b16 %v175
    %v651 = vunpack.c.h.b16 %v175
    %v652 = vunpack.c.l.b16 %v176
    %v653 = vunpack.c.h.b16 %v176
    %v654 = vunpack.c.l.b16 %v177
    %v655 = vunpack.c.h.b16 %v177
    %v656 = vunpack.c.l.b16 %v178
    %v657 = vunpack.c.h.b16 %v178
    %v658 = vunpack.c.l.b16 %v179
    %v659 = vunpack.c.h.b16 %v179
    %v660 = vunpack.c.l.b16 %v180
    %v661 = vunpack.c.h.b16 %v180
    %v662 = vunpack.c.l.b16 %v181
    %v663 = vunpack.c.h.b16 %v181
    %v664 = vunpack.c.l.b16 %v182
    %v665 = vunpack.c.h.b16 %v182
    %v666 = vunpack.c.l.b16 %v183
    %v667 = vunpack.c.h.b16 %v183
    %v668 = vunpack.c.l.b16 %v184
    %v669 = vunpack.c.h.b16 %v184
    %v670 = vunpack.c.l.b16 %v185
    %v671 = vunpack.c.h.b16 %v185
    %v672 = vunpack.c.l.b16 %v186
    %v673 = vunpack.c.h.b16 %v186
    %v674 = vunpack.c.l.b16 %v187
    %v675 = vunpack.c.h.b16 %v187
    %v676 = vunpack.c.l.b16 %v188
    %v677 = vunpack.c.h.b16 %v188
    %v678 = vunpack.c.l.b16 %v189
    %v679 = vunpack.c.h.b16 %v189
    %v680 = vunpack.c.l.b16 %v190
    %v681 = vunpack.c.h.b16 %v190
    %v682 = vunpack.c.l.b16 %v191
    %v683 = vunpack.c.h.b16 %v191
    %v684 = vunpack.c.l.b16 %v192
    %v685 = vunpack.c.h.b16 %v192
    %v686 = vunpack.c.l.b16 %v193
    %v687 = vunpack.c.h.b16 %v193
    %v688 = vunpack.c.l.b16 %v194
    %v689 = vunpack.c.h.b16 %v194
    %v690 = vunpack.c.l.b16 %v195
    %v691 = vunpack.c.h.b16 %v195
    %v692 = vunpack.c.l.b16 %v196
    %v693 = vunpack.c.h.b16 %v196
    %v694 = vunpack.c.l.b16 %v197
    %v695 = vunpack.c.h.b16 %v197
    %v696 = vunpack.c.l.b16 %v198
    %v697 = vunpack.c.h.b16 %v198
    %v698 = vunpack.c.l.b16 %v199
    %v699 = vunpack.c.h.b16 %v199
    %v700 = vunpack.c.l.b16 %v200
    %v701 = vunpack.c.h.b16 %v200
    %v702 = vunpack.c.l.b16 %v201
    %v703 = vunpack.c.h.b16 %v201
    %v704 = vunpack.c.l.b16 %v202
    %v705 = vunpack.c.h.b16 %v202
    %v706 = vunpack.c.l.b16 %v203
    %v707 = vunpack.c.h.b16 %v203
    %v708 = vunpack.c.l.b16 %v204
    %v709 = vunpack.c.h.b16 %v204
    %v710 = vunpack.c.l.b16 %v205
    %v711 = vunpack.c.h.b16 %v205
    %v712 = vunpack.c.l.b16 %v206
    %v713 = vunpack.c.h.b16 %v206
    %v714 = vunpack.c.l.b16 %v207
    %v715 = vunpack.c.h.b16 %v207
    %v716 = vunpack.c.l.b16 %v208
    %v717 = vunpack.c.h.b16 %v208
    %v718 = vunpack.c.l.b16 %v209
    %v719 = vunpack.c.h.b16 %v209
    %v720 = vunpack.c.l.b16 %v210
    %v721 = vunpack.c.h.b16 %v210
    %v722 = vunpack.c.l.b16 %v211
    %v723 = vunpack.c.h.b16 %v211
    %v724 = vunpack.c.l.b16 %v212
    %v725 = vunpack.c.h.b16 %v212
    %v726 = vunpack.c.l.b16 %v213
    %v727 = vunpack.c.h.b16 %v213
    %v728 = vunpack.c.l.b16 %v214
    %v729 = vunpack.c.h.b16 %v214
    %v730 = vunpack.c.l.b16 %v215
    %v731 = vunpack.c.h.b16 %v215
    %v732 = vunpack.c.l.b16 %v216
    %v733 = vunpack.c.h.b16 %v216
    %v734 = vunpack.c.l.b16 %v217
    %v735 = vunpack.c.h.b16 %v217
    %v736 = vunpack.c.l.b16 %v218
    %v737 = vunpack.c.h.b16 %v218
    %v738 = vunpack.c.l.b16 %v219
    %v739 = vunpack.c.h.b16 %v219
    %v740 = vunpack.c.l.b16 %v220
    %v741 = vunpack.c.h.b16 %v220
    %v742 = vunpack.c.l.b16 %v221
    %v743 = vunpack.c.h.b16 %v221
    %v744 = vunpack.c.l.b16 %v222
    %v745 = vunpack.c.h.b16 %v222
    %v746 = vunpack.c.l.b16 %v223
    %v747 = vunpack.c.h.b16 %v223
    %v748 = vunpack.c.l.b16 %v224
    %v749 = vunpack.c.h.b16 %v224
    %v750 = vunpack.c.l.b16 %v225
    %v751 = vunpack.c.h.b16 %v225
    %v752 = vunpack.c.l.b16 %v226
    %v753 = vunpack.c.h.b16 %v226
    %v754 = vunpack.c.l.b16 %v227
    %v755 = vunpack.c.h.b16 %v227
    %v756 = vunpack.c.l.b16 %v228
    %v757 = vunpack.c.h.b16 %v228
    %v758 = vunpack.c.l.b16 %v229
    %v759 = vunpack.c.h.b16 %v229
    %v760 = vunpack.c.l.b16 %v230
    %v761 = vunpack.c.h.b16 %v230
    %v762 = vunpack.c.l.b16 %v231
    %v763 = vunpack.c.h.b16 %v231
    %v764 = vunpack.c.l.b16 %v232
    %v765 = vunpack.c.h.b16 %v232
    %v766 = vunpack.c.l.b16 %v233
    %v767 = vunpack.c.h.b16 %v233
    %v768 = vunpack.c.l.b16 %v234
    %v769 = vunpack.c.h.b16 %v234
    %v770 = vunpack.c.l.b16 %v235
    %v771 = vunpack.c.h.b16 %v235
    %v772 = vunpack.c.l.b16 %v236
    %v773 = vunpack.c.h.b16 %v236
    %v774 = vunpack.c.l.b16 %v237
    %v775 = vunpack.c.h.b16 %v237
    %v776 = vunpack.c.l.b16 %v238
    %v777 = vunpack.c.h.b16 %v238
    %v778 = vunpack.c.l.b16 %v239
    %v779 = vunpack.c.h.b16 %v239
    %v780 = vunpack.c.l.b16 %v240
    %v781 = vunpack.c.h.b16 %v240
    %v782 = vunpack.c.l.b16 %v241
    %v783 = vunpack.c.h.b16 %v241
    %v784 = vunpack.c.l.b16 %v242
    %v785 = vunpack.c.h.b16 %v242
    %v786 = vunpack.c.l.b16 %v243
    %v787 = vunpack.c.h.b16 %v243
    %v788 = vunpack.c.l.b16 %v244
    %v789 = vunpack.c.h.b16 %v244
    %v790 = vunpack.c.l.b16 %v245
    %v791 = vunpack.c.h.b16 %v245
    %v792 = vunpack.c.l.b16 %v246
    %v793 = vunpack.c.h.b16 %v246
    %v794 = vunpack.c.l.b16 %v247
    %v795 = vunpack.c.h.b16 %v247
    %v796 = vunpack.c.l.b16 %v248
    %v797 = vunpack.c.h.b16 %v248
    %v798 = vunpack.c.l.b16 %v249
    %v799 = vunpack.c.h.b16 %v249
    %v800 = vunpack.c.l.b16 %v250
    %v801 = vunpack.c.h.b16 %v250
    %v802 = vunpack.c.l.b16 %v251
    %v803 = vunpack.c.h.b16 %v251
    %v804 = vunpack.c.l.b16 %v252
    %v805 = vunpack.c.h.b16 %v252
    %v806 = vunpack.c.l.b16 %v253
    %v807 = vunpack.c.h.b16 %v253
    %v808 = vunpack.c.l.b16 %v254
    %v809 = vunpack.c.h.b16 %v254
    %v810 = vunpack.c.l.b16 %v255
    %v811 = vunpack.c.h.b16 %v255
    %v812 = vunpack.c.l.b16 %v256
    %v813 = vunpack.c.h.b16 %v256
    %v814 = vunpack.c.l.b16 %v257
    %v815 = vunpack.c.h.b16 %v257
    %v816 = vunpack.c.l.b16 %v258
    %v817 = vunpack.c.h.b16 %v258
    %v818 = vunpack.c.l.b16 %v259
    %v819 = vunpack.c.h.b16 %v259
    %v820 = vunpack.c.l.b16 %v260
    %v821 = vunpack.c.h.b16 %v260
    %v822 = vunpack.c.l.b16 %v261
    %v823 = vunpack.c.h.b16 %v261
    %v824 = vunpack.c.l.b16 %v262
    %v825 = vunpack.c.h.b16 %v262
    %v826 = vunpack.c.l.b16 %v263
    %v827 = vunpack.c.h.b16 %v263
    %v828 = vunpack.c.l.b16 %v264
    %v829 = vunpack.c.h.b16 %v264
    %v830 = vunpack.c.l.b16 %v265
    %v831 = vunpack.c.h.b16 %v265
    %v832 = vunpack.c.l.b16 %v266
    %v833 = vunpack.c.h.b16 %v266
    %v834 = vunpack.c.l.b16 %v267
    %v835 = vunpack.c.h.b16 %v267
    %v836 = vunpack.c.l.b16 %v268
    %v837 = vunpack.c.h.b16 %v268
    %v838 = vunpack.c.l.b16 %v269
    %v839 = vunpack.c.h.b16 %v269
    %v840 = vunpack.c.l.b16 %v270
    %v841 = vunpack.c.h.b16 %v270
    %v842 = vunpack.c.l.b16 %v271
    %v843 = vunpack.c.h.b16 %v271
    %v844 = vunpack.c.l.b16 %v272
    %v845 = vunpack.c.h.b16 %v272
    %v846 = vunpack.c.l.b16 %v273
    %v847 = vunpack.c.h.b16 %v273
    %v848 = vunpack.c.l.b16 %v274
    %v849 = vunpack.c.h.b16 %v274
    %v850 = vunpack.c.l.b16 %v275
    %v851 = vunpack.c.h.b16 %v275
    %v852 = vunpack.c.l.b16 %v276
    %v853 = vunpack.c.h.b16 %v276
    %v854 = vunpack.c.l.b16 %v277
    %v855 = vunpack.c.h.b16 %v277
    %v856 = vunpack.c.l.b16 %v278
    %v857 = vunpack.c.h.b16 %v278
    %v858 = vunpack.c.l.b16 %v279
    %v859 = vunpack.c.h.b16 %v279
    %v860 = vunpack.c.l.b16 %v280
    %v861 = vunpack.c.h.b16 %v280
    %v862 = vunpack.c.l.b16 %v281
    %v863 = vunpack.c.h.b16 %v281
    %v864 = vunpack.c.l.b16 %v282
    %v865 = vunpack.c.h.b16 %v282
    %v866 = vunpack.c.l.b16 %v283
    %v867 = vunpack.c.h.b16 %v283
    %v868 = vunpack.c.l.b16 %v284
    %v869 = vunpack.c.h.b16 %v284
    %v870 = vunpack.c.l.b16 %v285
    %v871 = vunpack.c.h.b16 %v285
    %v872 = vunpack.c.l.b16 %v286
    %v873 = vunpack.c.h.b16 %v286
    %v874 = vunpack.c.l.b16 %v287
    %v875 = vunpack.c.h.b16 %v287
    %v876 = vunpack.c.l.b16 %v288
    %v877 = vunpack.c.h.b16 %v288
    %v878 = vunpack.c.l.b16 %v289
    %v879 = vunpack.c.h.b16 %v289
    %v880 = vunpack.c.l.b16 %v290
    %v881 = vunpack.c.h.b16 %v290
    %v882 = vunpack.c.l.b16 %v291
    %v883 = vunpack.c.h.b16 %v291
    %v884 = vunpack.c.l.b16 %v292
    %v885 = vunpack.c.h.b16 %v292
    %v886 = vunpack.c.l.b16 %v293
    %v887 = vunpack.c.h.b16 %v293
    %v888 = vunpack.c.l.b16 %v294
    %v889 = vunpack.c.h.b16 %v294
    %v890 = vunpack.c.l.b16 %v295
    %v891 = vunpack.c.h.b16 %v295
    %v892 = vunpack.c.l.b16 %v296
    %v893 = vunpack.c.h.b16 %v296
    %v894 = vunpack.c.l.b16 %v297
    %v895 = vunpack.c.h.b16 %v297
    %v896 = vunpack.c.l.b16 %v298
    %v897 = vunpack.c.h.b16 %v298
    %v898 = vunpack.c.l.b16 %v299
    %v899 = vunpack.c.h.b16 %v299
    %v900 = vunpack.c.l.b16 %v300
    %v901 = vunpack.c.h.b16 %v300
    %v902 = vunpack.c.l.b16 %v301
    %v903 = vunpack.c.h.b16 %v301
    %v904 = vunpack.c.l.b16 %v302
    %v905 = vunpack.c.h.b16 %v302
    %v906 = vunpack.c.l.b16 %v303
    %v907 = vunpack.c.h.b16 %v303
    %v908 = vunpack.c.l.b16 %v304
    %v909 = vunpack.c.h.b16 %v304
    %v910 = vunpack.c.l.b16 %v305
    %v911 = vunpack.c.h.b16 %v305
    %v912 = vunpack.c.l.b16 %v306
    %v913 = vunpack.c.h.b16 %v306
    %v914 = vunpack.c.l.b16 %v307
    %v915 = vunpack.c.h.b16 %v307
    %v916 = vunpack.c.l.b16 %v308
    %v917 = vunpack.c.h.b16 %v308
    %v918 = vunpack.c.l.b16 %v309
    %v919 = vunpack.c.h.b16 %v309
    %v920 = vunpack.c.l.b16 %v310
    %v921 = vunpack.c.h.b16 %v310
    %v922 = vunpack.c.l.b16 %v311
    %v923 = vunpack.c.h.b16 %v311
    %v924 = vunpack.c.l.b16 %v312
    %v925 = vunpack.c.h.b16 %v312
    %v926 = vunpack.c.l.b16 %v313
    %v927 = vunpack.c.h.b16 %v313
    %v928 = vunpack.c.l.b16 %v314
    %v929 = vunpack.c.h.b16 %v314
    %v930 = vunpack.c.l.b16 %v315
    %v931 = vunpack.c.h.b16 %v315
    %v932 = vunpack.c.l.b16 %v316
    %v933 = vunpack.c.h.b16 %v316
    %v934 = vunpack.c.l.b16 %v317
    %v935 = vunpack.c.h.b16 %v317
    %v936 = vunpack.c.l.b16 %v318
    %v937 = vunpack.c.h.b16 %v318
    %v938 = vunpack.c.l.b16 %v319
    %v939 = vunpack.c.h.b16 %v319
    %v940 = vunpack.c.l.b16 %v320
    %v941 = vunpack.c.h.b16 %v320
    %v942 = vunpack.c.l.b16 %v321
    %v943 = vunpack.c.h.b16 %v321
    %v944 = vunpack.c.l.b16 %v322
    %v945 = vunpack.c.h.b16 %v322
    %v946 = vunpack.c.l.b16 %v323
    %v947 = vunpack.c.h.b16 %v323
    %v948 = vunpack.c.l.b16 %v324
    %v949 = vunpack.c.h.b16 %v324
    %v950 = vunpack.c.l.b16 %v325
    %v951 = vunpack.c.h.b16 %v325
    %v952 = vunpack.c.l.b16 %v326
    %v953 = vunpack.c.h.b16 %v326
    %v954 = vunpack.c.l.b16 %v327
    %v955 = vunpack.c.h.b16 %v327
    %v956 = vunpack.c.l.b16 %v328
    %v957 = vunpack.c.h.b16 %v328
    %v958 = vunpack.c.l.b16 %v329
    %v959 = vunpack.c.h.b16 %v329
    %v960 = vunpack.c.l.b16 %v330
    %v961 = vunpack.c.h.b16 %v330
    %v962 = vunpack.c.l.b16 %v331
    %v963 = vunpack.c.h.b16 %v331
    %v964 = vunpack.c.l.b16 %v332
    %v965 = vunpack.c.h.b16 %v332
    %v966 = vunpack.c.l.b16 %v333
    %v967 = vunpack.c.h.b16 %v333
    %v968 = vpack.c.b16 %v580, %v576
    %v969 = vpack.c.b16 %v581, %v577
    %v970 = vpack.c.b16 %v582, %v578
    %v971 = vpack.c.b16 %v583, %v579
    %v972 = vpack.c.b16 %v588, %v584
    %v973 = vpack.c.b16 %v589, %v585
    %v974 = vpack.c.b16 %v590, %v586
    %v975 = vpack.c.b16 %v591, %v587
    %v976 = vpack.c.b16 %v596, %v592
    %v977 = vpack.c.b16 %v597, %v593
    %v978 = vpack.c.b16 %v598, %v594
    %v979 = vpack.c.b16 %v599, %v595
    %v980 = vpack.c.b16 %v604, %v600
    %v981 = vpack.c.b16 %v605, %v601
    %v982 = vpack.c.b16 %v606, %v602
    %v983 = vpack.c.b16 %v607, %v603
    %v984 = vpack.c.b16 %v612, %v608
    %v985 = vpack.c.b16 %v613, %v609
    %v986 = vpack.c.b16 %v614, %v610
    %v987 = vpack.c.b16 %v615, %v611
    %v988 = vpack.c.b16 %v620, %v616
    %v989 = vpack.c.b16 %v621, %v617
    %v990 = vpack.c.b16 %v622, %v618
    %v991 = vpack.c.b16 %v623, %v619
    %v992 = vpack.c.b16 %v628, %v624
    %v993 = vpack.c.b16 %v629, %v625
    %v994 = vpack.c.b16 %v630, %v626
    %v995 = vpack.c.b16 %v631, %v627
    %v996 = vpack.c.b16 %v636, %v632
    %v997 = vpack.c.b16 %v637, %v633
    %v998 = vpack.c.b16 %v638, %v634
    %v999 = vpack.c.b16 %v639, %v635
    %v1000 = vpack.c.b16 %v644, %v640
    %v1001 = vpack.c.b16 %v645, %v641
    %v1002 = vpack.c.b16 %v646, %v642
    %v1003 = vpack.c.b16 %v647, %v643
    %v1004 = vpack.c.b16 %v652, %v648
    %v1005 = vpack.c.b16 %v653, %v649
    %v1006 = vpack.c.b16 %v654, %v650
    %v1007 = vpack.c.b16 %v655, %v651
    %v1008 = vpack.c.b16 %v660, %v656
    %v1009 = vpack.c.b16 %v661, %v657
    %v1010 = vpack.c.b16 %v662, %v658
    %v1011 = vpack.c.b16 %v663, %v659
    %v1012 = vpack.c.b16 %v668, %v664
    %v1013 = vpack.c.b16 %v669, %v665
    %v1014 = vpack.c.b16 %v670, %v666
    %v1015 = vpack.c.b16 %v671, %v667
    %v1016 = vpack.c.b16 %v676, %v672
    %v1017 = vpack.c.b16 %v677, %v673
    %v1018 = vpack.c.b16 %v678, %v674
    %v1019 = vpack.c.b16 %v679, %v675
    %v1020 = vpack.c.b16 %v684, %v680
    %v1021 = vpack.c.b16 %v685, %v681
    %v1022 = vpack.c.b16 %v686, %v682
    %v1023 = vpack.c.b16 %v687, %v683
    %v1024 = vpack.c.b16 %v692, %v688
    %v1025 = vpack.c.b16 %v693, %v689
    %v1026 = vpack.c.b16 %v694, %v690
    %v1027 = vpack.c.b16 %v695, %v691
    %v1028 = vpack.c.b16 %v700, %v696
    %v1029 = vpack.c.b16 %v701, %v697
    %v1030 = vpack.c.b16 %v702, %v698
    %v1031 = vpack.c.b16 %v703, %v699
    %v1032 = vpack.c.b16 %v708, %v704
    %v1033 = vpack.c.b16 %v709, %v705
    %v1034 = vpack.c.b16 %v710, %v706
    %v1035 = vpack.c.b16 %v711, %v707
    %v1036 = vpack.c.b16 %v716, %v712
    %v1037 = vpack.c.b16 %v717, %v713
    %v1038 = vpack.c.b16 %v718, %v714
    %v1039 = vpack.c.b16 %v719, %v715
    %v1040 = vpack.c.b16 %v724, %v720
    %v1041 = vpack.c.b16 %v725, %v721
    %v1042 = vpack.c.b16 %v726, %v722
    %v1043 = vpack.c.b16 %v727, %v723
    %v1044 = vpack.c.b16 %v732, %v728
    %v1045 = vpack.c.b16 %v733, %v729
    %v1046 = vpack.c.b16 %v734, %v730
    %v1047 = vpack.c.b16 %v735, %v731
    %v1048 = vpack.c.b16 %v740, %v736
    %v1049 = vpack.c.b16 %v741, %v737
    %v1050 = vpack.c.b16 %v742, %v738
    %v1051 = vpack.c.b16 %v743, %v739
    %v1052 = vpack.c.b16 %v748, %v744
    %v1053 = vpack.c.b16 %v749, %v745
    %v1054 = vpack.c.b16 %v750, %v746
    %v1055 = vpack.c.b16 %v751, %v747
    %v1056 = vpack.c.b16 %v756, %v752
    %v1057 = vpack.c.b16 %v757, %v753
    %v1058 = vpack.c.b16 %v758, %v754
    %v1059 = vpack.c.b16 %v759, %v755
    %v1060 = vpack.c.b16 %v764, %v760
    %v1061 = vpack.c.b16 %v765, %v761
    %v1062 = vpack.c.b16 %v766, %v762
    %v1063 = vpack.c.b16 %v767, %v763
    %v1064 = vpack.c.b16 %v772, %v768
    %v1065 = vpack.c.b16 %v773, %v769
    %v1066 = vpack.c.b16 %v774, %v770
    %v1067 = vpack.c.b16 %v775, %v771
    %v1068 = vpack.c.b16 %v780, %v776
    %v1069 = vpack.c.b16 %v781, %v777
    %v1070 = vpack.c.b16 %v782, %v778
    %v1071 = vpack.c.b16 %v783, %v779
    %v1072 = vpack.c.b16 %v788, %v784
    %v1073 = vpack.c.b16 %v789, %v785
    %v1074 = vpack.c.b16 %v790, %v786
    %v1075 = vpack.c.b16 %v791, %v787
    %v1076 = vpack.c.b16 %v796, %v792
    %v1077 = vpack.c.b16 %v797, %v793
    %v1078 = vpack.c.b16 %v798, %v794
    %v1079 = vpack.c.b16 %v799, %v795
    %v1080 = vpack.c.b16 %v804, %v800
    %v1081 = vpack.c.b16 %v805, %v801
    %v1082 = vpack.c.b16 %v806, %v802
    %v1083 = vpack.c.b16 %v807, %v803
    %v1084 = vpack.c.b16 %v812, %v808
    %v1085 = vpack.c.b16 %v813, %v809
    %v1086 = vpack.c.b16 %v814, %v810
    %v1087 = vpack.c.b16 %v815, %v811
    %v1088 = vpack.c.b16 %v820, %v816
    %v1089 = vpack.c.b16 %v821, %v817
    %v1090 = vpack.c.b16 %v822, %v818
    %v1091 = vpack.c.b16 %v823, %v819
    %v1092 = vpack.c.b16 %v828, %v824
    %v1093 = vpack.c.b16 %v829, %v825
    %v1094 = vpack.c.b16 %v830, %v826
    %v1095 = vpack.c.b16 %v831, %v827
    %v1096 = vpack.c.b16 %v836, %v832
    %v1097 = vpack.c.b16 %v837, %v833
    %v1098 = vpack.c.b16 %v838, %v834
    %v1099 = vpack.c.b16 %v839, %v835
    %v1100 = vpack.c.b16 %v844, %v840
    %v1101 = vpack.c.b16 %v845, %v841
    %v1102 = vpack.c.b16 %v846, %v842
    %v1103 = vpack.c.b16 %v847, %v843
    %v1104 = vpack.c.b16 %v852, %v848
    %v1105 = vpack.c.b16 %v853, %v849
    %v1106 = vpack.c.b16 %v854, %v850
    %v1107 = vpack.c.b16 %v855, %v851
    %v1108 = vpack.c.b16 %v860, %v856
    %v1109 = vpack.c.b16 %v861, %v857
    %v1110 = vpack.c.b16 %v862, %v858
    %v1111 = vpack.c.b16 %v863, %v859
    %v1112 = vpack.c.b16 %v868, %v864
    %v1113 = vpack.c.b16 %v869, %v865
    %v1114 = vpack.c.b16 %v870, %v866
    %v1115 = vpack.c.b16 %v871, %v867
    %v1116 = vpack.c.b16 %v876, %v872
    %v1117 = vpack.c.b16 %v877, %v873
    %v1118 = vpack.c.b16 %v878, %v874
    %v1119 = vpack.c.b16 %v879, %v875
    %v1120 = vpack.c.b16 %v884, %v880
    %v1121 = vpack.c.b16 %v885, %v881
    %v1122 = vpack.c.b16 %v886, %v882
    %v1123 = vpack.c.b16 %v887, %v883
    %v1124 = vpack.c.b16 %v892, %v888
    %v1125 = vpack.c.b16 %v893, %v889
    %v1126 = vpack.c.b16 %v894, %v890
    %v1127 = vpack.c.b16 %v895, %v891
    %v1128 = vpack.c.b16 %v900, %v896
    %v1129 = vpack.c.b16 %v901, %v897
    %v1130 = vpack.c.b16 %v902, %v898
    %v1131 = vpack.c.b16 %v903, %v899
    %v1132 = vpack.c.b16 %v908, %v904
    %v1133 = vpack.c.b16 %v909, %v905
    %v1134 = vpack.c.b16 %v910, %v906
    %v1135 = vpack.c.b16 %v911, %v907
    %v1136 = vpack.c.b16 %v916, %v912
    %v1137 = vpack.c.b16 %v917, %v913
    %v1138 = vpack.c.b16 %v918, %v914
    %v1139 = vpack.c.b16 %v919, %v915
    %v1140 = vpack.c.b16 %v924, %v920
    %v1141 = vpack.c.b16 %v925, %v921
    %v1142 = vpack.c.b16 %v926, %v922
    %v1143 = vpack.c.b16 %v927, %v923
    %v1144 = vpack.c.b16 %v932, %v928
    %v1145 = vpack.c.b16 %v933, %v929
    %v1146 = vpack.c.b16 %v934, %v930
    %v1147 = vpack.c.b16 %v935, %v931
    %v1148 = vpack.c.b16 %v940, %v936
    %v1149 = vpack.c.b16 %v941, %v937
    %v1150 = vpack.c.b16 %v942, %v938
    %v1151 = vpack.c.b16 %v943, %v939
    %v1152 = vpack.c.b16 %v948, %v944
    %v1153 = vpack.c.b16 %v949, %v945
    %v1154 = vpack.c.b16 %v950, %v946
    %v1155 = vpack.c.b16 %v951, %v947
    %v1156 = vpack.c.b16 %v956, %v952
    %v1157 = vpack.c.b16 %v957, %v953
    %v1158 = vpack.c.b16 %v958, %v954
    %v1159 = vpack.c.b16 %v959, %v955
    %v1160 = vpack.c.b16 %v964, %v960
    %v1161 = vpack.c.b16 %v965, %v961
    %v1162 = vpack.c.b16 %v966, %v962
    %v1163 = vpack.c.b16 %v967, %v963
    %vm1360 = vcmask 130048
    %v1362 = vsel %vm1360, %v373, 0
    %1364 = vmatprep.subr.bf16.mxu0 %v997
    %1365 = vmatpush1.bf16.msra.mxu0 %v996
    %1366 = vmatprep.subr.bf16.mxu0 %v993
    %1367 = vmatpush1.bf16.msra.mxu0 %v992
    %1368 = vmatprep.subr.bf16.mxu0 %v989
    %1369 = vmatpush1.bf16.msra.mxu0 %v988
    %1370 = vmatprep.subr.bf16.mxu0 %v985
    %1371 = vmatpush1.bf16.msra.mxu0 %v984
    %1372 = vmatprep.subr.bf16.mxu0 %v981
    %1373 = vmatpush1.bf16.msra.mxu0 %v980
    %1374 = vmatprep.subr.bf16.mxu0 %v977
    %1375 = vmatpush1.bf16.msra.mxu0 %v976
    %1376 = vmatprep.subr.bf16.mxu0 %v973
    %1377 = vmatpush1.bf16.msra.mxu0 %v972
    %1378 = vmatprep.subr.bf16.mxu0 %v969
    %1379 = vmatpush1.bf16.msra.mxu0 %v968
    %1380 = vmatprep.subr.bf16.mxu0 %v1029
    %1381 = vmatpush2.bf16.msra.mxu0 %v1028
    %1382 = vmatprep.subr.bf16.mxu0 %v1025
    %1383 = vmatpush2.bf16.msra.mxu0 %v1024
    %1384 = vmatprep.subr.bf16.mxu0 %v1021
    %1385 = vmatpush2.bf16.msra.mxu0 %v1020
    %1386 = vmatprep.subr.bf16.mxu0 %v1017
    %1387 = vmatpush2.bf16.msra.mxu0 %v1016
    %1388 = vmatprep.subr.bf16.mxu0 %v1013
    %1389 = vmatpush2.bf16.msra.mxu0 %v1012
    %1390 = vmatprep.subr.bf16.mxu0 %v1009
    %1391 = vmatpush2.bf16.msra.mxu0 %v1008
    %1392 = vmatprep.subr.bf16.mxu0 %v1005
    %1393 = vmatpush2.bf16.msra.mxu0 %v1004
    %1394 = vmatprep.subr.bf16.mxu0 %v1001
    %1395 = vmatpush2.bf16.msra.mxu0 %v1000
    %1396 = vmatprep.mubr.bf16.mxu0 %v368
    %1397 = vmatmul.mubr.bf16.gmra.mxu0 %v367
    %v1398 = vpop.f32.mrf.mxu0
    %v1399 = vadd.f32 %v339, %v1398
    %v1400 = vpop.f32.mrf.mxu0
    %v1401 = vadd.f32 %v343, %v1400
    %v1402 = vpop.f32.mrf.mxu0
    %v1403 = vpop.f32.mrf.mxu0
    %1404 = vdwg.mxu0
    %1405 = vmatprep.subr.bf16.mxu0 %v1061
    %1406 = vmatpush1.bf16.msra.mxu0 %v1060
    %1407 = vmatprep.subr.bf16.mxu0 %v1057
    %1408 = vmatpush1.bf16.msra.mxu0 %v1056
    %1409 = vmatprep.subr.bf16.mxu0 %v1053
    %1410 = vmatpush1.bf16.msra.mxu0 %v1052
    %1411 = vmatprep.subr.bf16.mxu0 %v1049
    %1412 = vmatpush1.bf16.msra.mxu0 %v1048
    %1413 = vmatprep.subr.bf16.mxu0 %v1045
    %1414 = vmatpush1.bf16.msra.mxu0 %v1044
    %1415 = vmatprep.subr.bf16.mxu0 %v1041
    %1416 = vmatpush1.bf16.msra.mxu0 %v1040
    %1417 = vmatprep.subr.bf16.mxu0 %v1037
    %1418 = vmatpush1.bf16.msra.mxu0 %v1036
    %1419 = vmatprep.subr.bf16.mxu0 %v1033
    %1420 = vmatpush1.bf16.msra.mxu0 %v1032
    %1421 = vmatprep.subr.bf16.mxu0 %v1093
    %1422 = vmatpush2.bf16.msra.mxu0 %v1092
    %1423 = vmatprep.subr.bf16.mxu0 %v1089
    %1424 = vmatpush2.bf16.msra.mxu0 %v1088
    %1425 = vmatprep.subr.bf16.mxu0 %v1085
    %1426 = vmatpush2.bf16.msra.mxu0 %v1084
    %1427 = vmatprep.subr.bf16.mxu0 %v1081
    %1428 = vmatpush2.bf16.msra.mxu0 %v1080
    %1429 = vmatprep.subr.bf16.mxu0 %v1077
    %1430 = vmatpush2.bf16.msra.mxu0 %v1076
    %1431 = vmatprep.subr.bf16.mxu0 %v1073
    %1432 = vmatpush2.bf16.msra.mxu0 %v1072
    %1433 = vmatprep.subr.bf16.mxu0 %v1069
    %1434 = vmatpush2.bf16.msra.mxu0 %v1068
    %1435 = vmatprep.subr.bf16.mxu0 %v1065
    %1436 = vmatpush2.bf16.msra.mxu0 %v1064
    %1437 = vmatprep.mubr.bf16.mxu0 %v370
    %1438 = vmatmul.mubr.bf16.gmra.mxu0 %v369
    %v1439 = vpop.f32.mrf.mxu0
    %v1440 = vadd.f32 %v1399, %v1439
    %v1441 = vpop.f32.mrf.mxu0
    %v1442 = vadd.f32 %v1401, %v1441
    %v1443 = vpop.f32.mrf.mxu0
    %v1444 = vpop.f32.mrf.mxu0
    %1445 = vdwg.mxu0
    %1446 = vmatprep.subr.bf16.mxu0 %v1125
    %1447 = vmatpush1.bf16.msra.mxu0 %v1124
    %1448 = vmatprep.subr.bf16.mxu0 %v1121
    %1449 = vmatpush1.bf16.msra.mxu0 %v1120
    %1450 = vmatprep.subr.bf16.mxu0 %v1117
    %1451 = vmatpush1.bf16.msra.mxu0 %v1116
    %1452 = vmatprep.subr.bf16.mxu0 %v1113
    %1453 = vmatpush1.bf16.msra.mxu0 %v1112
    %1454 = vmatprep.subr.bf16.mxu0 %v1109
    %1455 = vmatpush1.bf16.msra.mxu0 %v1108
    %1456 = vmatprep.subr.bf16.mxu0 %v1105
    %1457 = vmatpush1.bf16.msra.mxu0 %v1104
    %1458 = vmatprep.subr.bf16.mxu0 %v1101
    %1459 = vmatpush1.bf16.msra.mxu0 %v1100
    %1460 = vmatprep.subr.bf16.mxu0 %v1097
    %1461 = vmatpush1.bf16.msra.mxu0 %v1096
    %1462 = vmatprep.subr.bf16.mxu0 %v1157
    %1463 = vmatpush2.bf16.msra.mxu0 %v1156
    %1464 = vmatprep.subr.bf16.mxu0 %v1153
    %1465 = vmatpush2.bf16.msra.mxu0 %v1152
    %1466 = vmatprep.subr.bf16.mxu0 %v1149
    %1467 = vmatpush2.bf16.msra.mxu0 %v1148
    %1468 = vmatprep.subr.bf16.mxu0 %v1145
    %1469 = vmatpush2.bf16.msra.mxu0 %v1144
    %1470 = vmatprep.subr.bf16.mxu0 %v1141
    %1471 = vmatpush2.bf16.msra.mxu0 %v1140
    %1472 = vmatprep.subr.bf16.mxu0 %v1137
    %1473 = vmatpush2.bf16.msra.mxu0 %v1136
    %1474 = vmatprep.subr.bf16.mxu0 %v1133
    %1475 = vmatpush2.bf16.msra.mxu0 %v1132
    %1476 = vmatprep.subr.bf16.mxu0 %v1129
    %1477 = vmatpush2.bf16.msra.mxu0 %v1128
    %1478 = vmatprep.mubr.bf16.mxu0 %v372
    %1479 = vmatmul.mubr.bf16.gmra.mxu0 %v371
    %v1480 = vpop.f32.mrf.mxu0
    %v1481 = vadd.f32 %v1440, %v1480
    %v1482 = vpop.f32.mrf.mxu0
    %v1483 = vadd.f32 %v1442, %v1482
    %v1484 = vpop.f32.mrf.mxu0
    %v1485 = vpop.f32.mrf.mxu0
    %1486 = vdwg.mxu0
    %1487 = vmatprep.subr.bf16.mxu0 0
    %1488 = vmatpush1.bf16.msra.mxu0 0
    %1489 = vmatprep.subr.bf16.mxu0 0
    %1490 = vmatpush1.bf16.msra.mxu0 0
    %1491 = vmatprep.subr.bf16.mxu0 0
    %1492 = vmatpush1.bf16.msra.mxu0 0
    %1493 = vmatprep.subr.bf16.mxu0 0
    %1494 = vmatpush1.bf16.msra.mxu0 0
    %1495 = vmatprep.subr.bf16.mxu0 0
    %1496 = vmatpush1.bf16.msra.mxu0 0
    %1497 = vmatprep.subr.bf16.mxu0 0
    %1498 = vmatpush1.bf16.msra.mxu0 0
    %1499 = vmatprep.subr.bf16.mxu0 0
    %1500 = vmatpush1.bf16.msra.mxu0 0
    %1501 = vmatprep.subr.bf16.mxu0 %v1161
    %1502 = vmatpush1.bf16.msra.mxu0 %v1160
    %1503 = vmatprep.subr.bf16.mxu0 0
    %1504 = vmatpush2.bf16.msra.mxu0 0
    %1505 = vmatprep.subr.bf16.mxu0 0
    %1506 = vmatpush2.bf16.msra.mxu0 0
    %1507 = vmatprep.subr.bf16.mxu0 0
    %1508 = vmatpush2.bf16.msra.mxu0 0
    %1509 = vmatprep.subr.bf16.mxu0 0
    %1510 = vmatpush2.bf16.msra.mxu0 0
    %1511 = vmatprep.subr.bf16.mxu0 0
    %1512 = vmatpush2.bf16.msra.mxu0 0
    %1513 = vmatprep.subr.bf16.mxu0 0
    %1514 = vmatpush2.bf16.msra.mxu0 0
    %1515 = vmatprep.subr.bf16.mxu0 0
    %1516 = vmatpush2.bf16.msra.mxu0 0
    %1517 = vmatprep.subr.bf16.mxu0 0
    %1518 = vmatpush2.bf16.msra.mxu0 0
    %1519 = vmatprep.mubr.bf16.mxu0 0
    %1520 = vmatmul.mubr.bf16.gmra.mxu0 %v1362
    %v1521 = vpop.f32.mrf.mxu0
    %v1522 = vadd.f32 %v1481, %v1521
    %v1523 = vpop.f32.mrf.mxu0
    %v1524 = vadd.f32 %v1483, %v1523
    %v1525 = vpop.f32.mrf.mxu0
    %v1526 = vpop.f32.mrf.mxu0
    %1527 = vdwg.mxu0
    %1528 = vmatprep.subr.bf16.mxu0 %v999
    %1529 = vmatpush1.bf16.msra.mxu0 %v998
    %1530 = vmatprep.subr.bf16.mxu0 %v995
    %1531 = vmatpush1.bf16.msra.mxu0 %v994
    %1532 = vmatprep.subr.bf16.mxu0 %v991
    %1533 = vmatpush1.bf16.msra.mxu0 %v990
    %1534 = vmatprep.subr.bf16.mxu0 %v987
    %1535 = vmatpush1.bf16.msra.mxu0 %v986
    %1536 = vmatprep.subr.bf16.mxu0 %v983
    %1537 = vmatpush1.bf16.msra.mxu0 %v982
    %1538 = vmatprep.subr.bf16.mxu0 %v979
    %1539 = vmatpush1.bf16.msra.mxu0 %v978
    %1540 = vmatprep.subr.bf16.mxu0 %v975
    %1541 = vmatpush1.bf16.msra.mxu0 %v974
    %1542 = vmatprep.subr.bf16.mxu0 %v971
    %1543 = vmatpush1.bf16.msra.mxu0 %v970
    %1544 = vmatprep.subr.bf16.mxu0 %v1031
    %1545 = vmatpush2.bf16.msra.mxu0 %v1030
    %1546 = vmatprep.subr.bf16.mxu0 %v1027
    %1547 = vmatpush2.bf16.msra.mxu0 %v1026
    %1548 = vmatprep.subr.bf16.mxu0 %v1023
    %1549 = vmatpush2.bf16.msra.mxu0 %v1022
    %1550 = vmatprep.subr.bf16.mxu0 %v1019
    %1551 = vmatpush2.bf16.msra.mxu0 %v1018
    %1552 = vmatprep.subr.bf16.mxu0 %v1015
    %1553 = vmatpush2.bf16.msra.mxu0 %v1014
    %1554 = vmatprep.subr.bf16.mxu0 %v1011
    %1555 = vmatpush2.bf16.msra.mxu0 %v1010
    %1556 = vmatprep.subr.bf16.mxu0 %v1007
    %1557 = vmatpush2.bf16.msra.mxu0 %v1006
    %1558 = vmatprep.subr.bf16.mxu0 %v1003
    %1559 = vmatpush2.bf16.msra.mxu0 %v1002
    %1560 = vmatprep.mubr.bf16.mxu0 %v368
    %1561 = vmatmul.mubr.bf16.gmra.mxu0 %v367
    %v1562 = vpop.f32.mrf.mxu0
    %v1563 = vadd.f32 %v347, %v1562
    %v1564 = vpop.f32.mrf.mxu0
    %v1565 = vadd.f32 %v351, %v1564
    %v1566 = vpop.f32.mrf.mxu0
    %v1567 = vpop.f32.mrf.mxu0
    %1568 = vdwg.mxu0
    %1569 = vmatprep.subr.bf16.mxu0 %v1063
    %1570 = vmatpush1.bf16.msra.mxu0 %v1062
    %1571 = vmatprep.subr.bf16.mxu0 %v1059
    %1572 = vmatpush1.bf16.msra.mxu0 %v1058
    %1573 = vmatprep.subr.bf16.mxu0 %v1055
    %1574 = vmatpush1.bf16.msra.mxu0 %v1054
    %1575 = vmatprep.subr.bf16.mxu0 %v1051
    %1576 = vmatpush1.bf16.msra.mxu0 %v1050
    %1577 = vmatprep.subr.bf16.mxu0 %v1047
    %1578 = vmatpush1.bf16.msra.mxu0 %v1046
    %1579 = vmatprep.subr.bf16.mxu0 %v1043
    %1580 = vmatpush1.bf16.msra.mxu0 %v1042
    %1581 = vmatprep.subr.bf16.mxu0 %v1039
    %1582 = vmatpush1.bf16.msra.mxu0 %v1038
    %1583 = vmatprep.subr.bf16.mxu0 %v1035
    %1584 = vmatpush1.bf16.msra.mxu0 %v1034
    %1585 = vmatprep.subr.bf16.mxu0 %v1095
    %1586 = vmatpush2.bf16.msra.mxu0 %v1094
    %1587 = vmatprep.subr.bf16.mxu0 %v1091
    %1588 = vmatpush2.bf16.msra.mxu0 %v1090
    %1589 = vmatprep.subr.bf16.mxu0 %v1087
    %1590 = vmatpush2.bf16.msra.mxu0 %v1086
    %1591 = vmatprep.subr.bf16.mxu0 %v1083
    %1592 = vmatpush2.bf16.msra.mxu0 %v1082
    %1593 = vmatprep.subr.bf16.mxu0 %v1079
    %1594 = vmatpush2.bf16.msra.mxu0 %v1078
    %1595 = vmatprep.subr.bf16.mxu0 %v1075
    %1596 = vmatpush2.bf16.msra.mxu0 %v1074
    %1597 = vmatprep.subr.bf16.mxu0 %v1071
    %1598 = vmatpush2.bf16.msra.mxu0 %v1070
    %1599 = vmatprep.subr.bf16.mxu0 %v1067
    %1600 = vmatpush2.bf16.msra.mxu0 %v1066
    %1601 = vmatprep.mubr.bf16.mxu0 %v370
    %1602 = vmatmul.mubr.bf16.gmra.mxu0 %v369
    %v1603 = vpop.f32.mrf.mxu0
    %v1604 = vadd.f32 %v1563, %v1603
    %v1605 = vpop.f32.mrf.mxu0
    %v1606 = vadd.f32 %v1565, %v1605
    %v1607 = vpop.f32.mrf.mxu0
    %v1608 = vpop.f32.mrf.mxu0
    %1609 = vdwg.mxu0
    %1610 = vmatprep.subr.bf16.mxu0 %v1127
    %1611 = vmatpush1.bf16.msra.mxu0 %v1126
    %1612 = vmatprep.subr.bf16.mxu0 %v1123
    %1613 = vmatpush1.bf16.msra.mxu0 %v1122
    %1614 = vmatprep.subr.bf16.mxu0 %v1119
    %1615 = vmatpush1.bf16.msra.mxu0 %v1118
    %1616 = vmatprep.subr.bf16.mxu0 %v1115
    %1617 = vmatpush1.bf16.msra.mxu0 %v1114
    %1618 = vmatprep.subr.bf16.mxu0 %v1111
    %1619 = vmatpush1.bf16.msra.mxu0 %v1110
    %1620 = vmatprep.subr.bf16.mxu0 %v1107
    %1621 = vmatpush1.bf16.msra.mxu0 %v1106
    %1622 = vmatprep.subr.bf16.mxu0 %v1103
    %1623 = vmatpush1.bf16.msra.mxu0 %v1102
    %1624 = vmatprep.subr.bf16.mxu0 %v1099
    %1625 = vmatpush1.bf16.msra.mxu0 %v1098
    %1626 = vmatprep.subr.bf16.mxu0 %v1159
    %1627 = vmatpush2.bf16.msra.mxu0 %v1158
    %1628 = vmatprep.subr.bf16.mxu0 %v1155
    %1629 = vmatpush2.bf16.msra.mxu0 %v1154
    %1630 = vmatprep.subr.bf16.mxu0 %v1151
    %1631 = vmatpush2.bf16.msra.mxu0 %v1150
    %1632 = vmatprep.subr.bf16.mxu0 %v1147
    %1633 = vmatpush2.bf16.msra.mxu0 %v1146
    %1634 = vmatprep.subr.bf16.mxu0 %v1143
    %1635 = vmatpush2.bf16.msra.mxu0 %v1142
    %1636 = vmatprep.subr.bf16.mxu0 %v1139
    %1637 = vmatpush2.bf16.msra.mxu0 %v1138
    %1638 = vmatprep.subr.bf16.mxu0 %v1135
    %1639 = vmatpush2.bf16.msra.mxu0 %v1134
    %1640 = vmatprep.subr.bf16.mxu0 %v1131
    %1641 = vmatpush2.bf16.msra.mxu0 %v1130
    %1642 = vmatprep.mubr.bf16.mxu0 %v372
    %1643 = vmatmul.mubr.bf16.gmra.mxu0 %v371
    %v1644 = vpop.f32.mrf.mxu0
    %v1645 = vadd.f32 %v1604, %v1644
    %v1646 = vpop.f32.mrf.mxu0
    %v1647 = vadd.f32 %v1606, %v1646
    %v1648 = vpop.f32.mrf.mxu0
    %v1649 = vpop.f32.mrf.mxu0
    %1650 = vdwg.mxu0
    %1651 = vmatprep.subr.bf16.mxu0 0
    %1652 = vmatpush1.bf16.msra.mxu0 0
    %1653 = vmatprep.subr.bf16.mxu0 0
    %1654 = vmatpush1.bf16.msra.mxu0 0
    %1655 = vmatprep.subr.bf16.mxu0 0
    %1656 = vmatpush1.bf16.msra.mxu0 0
    %1657 = vmatprep.subr.bf16.mxu0 0
    %1658 = vmatpush1.bf16.msra.mxu0 0
    %1659 = vmatprep.subr.bf16.mxu0 0
    %1660 = vmatpush1.bf16.msra.mxu0 0
    %1661 = vmatprep.subr.bf16.mxu0 0
    %1662 = vmatpush1.bf16.msra.mxu0 0
    %1663 = vmatprep.subr.bf16.mxu0 0
    %1664 = vmatpush1.bf16.msra.mxu0 0
    %1665 = vmatprep.subr.bf16.mxu0 %v1163
    %1666 = vmatpush1.bf16.msra.mxu0 %v1162
    %1667 = vmatprep.subr.bf16.mxu0 0
    %1668 = vmatpush2.bf16.msra.mxu0 0
    %1669 = vmatprep.subr.bf16.mxu0 0
    %1670 = vmatpush2.bf16.msra.mxu0 0
    %1671 = vmatprep.subr.bf16.mxu0 0
    %1672 = vmatpush2.bf16.msra.mxu0 0
    %1673 = vmatprep.subr.bf16.mxu0 0
    %1674 = vmatpush2.bf16.msra.mxu0 0
    %1675 = vmatprep.subr.bf16.mxu0 0
    %1676 = vmatpush2.bf16.msra.mxu0 0
    %1677 = vmatprep.subr.bf16.mxu0 0
    %1678 = vmatpush2.bf16.msra.mxu0 0
    %1679 = vmatprep.subr.bf16.mxu0 0
    %1680 = vmatpush2.bf16.msra.mxu0 0
    %1681 = vmatprep.subr.bf16.mxu0 0
    %1682 = vmatpush2.bf16.msra.mxu0 0
    %1683 = vmatprep.mubr.bf16.mxu0 0
    %1684 = vmatmul.mubr.bf16.gmra.mxu0 %v1362
    %v1685 = vpop.f32.mrf.mxu0
    %v1686 = vadd.f32 %v1645, %v1685
    %v1687 = vpop.f32.mrf.mxu0
    %v1688 = vadd.f32 %v1647, %v1687
    %v1689 = vpop.f32.mrf.mxu0
    %v1690 = vpop.f32.mrf.mxu0
    %1691 = vdwg.mxu0
    %v1692 = vmax.f32 %v1522, 0.0
    %v1693 = vmax.f32 %v1524, 0.0
    %v1694 = vmax.f32 %v1686, 0.0
    %v1695 = vmax.f32 %v1688, 0.0
    %v1696 = vpack.c.bf16 %v1692, %v1692
    %v1697 = vpack.c.bf16 %v1693, %v1693
    %v1698 = vpack.c.bf16 %v1694, %v1694
    %v1699 = vpack.c.bf16 %v1695, %v1695
    %v1700 = vld [vmem:[#allocation8] sm:$0xff]
    %v1701 = vld [vmem:[#allocation8 + $0x8] sm:$0xff]
    %v1702 = vld [vmem:[#allocation8 + $0x10] sm:$0xff]
    %v1703 = vld [vmem:[#allocation8 + $0x18] sm:$0xff]
    %v1704 = vld [vmem:[#allocation8 + $0x20] sm:$0xff]
    %v1705 = vld [vmem:[#allocation8 + $0x28] sm:$0xff]
    %v1706 = vld [vmem:[#allocation8 + $0x30] sm:$0xff]
    %v1707 = vld [vmem:[#allocation8 + $0x38] sm:$0xff]
    %v1708 = vld [vmem:[#allocation8 + $0x40] sm:$0xff]
    %v1709 = vld [vmem:[#allocation8 + $0x48] sm:$0xff]
    %v1710 = vld [vmem:[#allocation8 + $0x50] sm:$0xff]
    %v1711 = vld [vmem:[#allocation8 + $0x58] sm:$0xff]
    %v1712 = vld [vmem:[#allocation8 + $0x60] sm:$0xff]
    %v1713 = vld [vmem:[#allocation8 + $0x68] sm:$0xff]
    %v1714 = vld [vmem:[#allocation8 + $0x70] sm:$0xff]
    %v1715 = vld [vmem:[#allocation8 + $0x78] sm:$0xff]
    %v1716 = vld [vmem:[#allocation8 + $0x80] sm:$0xff]
    %v1717 = vld [vmem:[#allocation8 + $0x88] sm:$0xff]
    %v1718 = vld [vmem:[#allocation8 + $0x90] sm:$0xff]
    %v1719 = vld [vmem:[#allocation8 + $0x98] sm:$0xff]
    %v1720 = vld [vmem:[#allocation8 + $0xa0] sm:$0xff]
    %v1721 = vld [vmem:[#allocation8 + $0xa8] sm:$0xff]
    %v1722 = vld [vmem:[#allocation8 + $0xb0] sm:$0xff]
    %v1723 = vld [vmem:[#allocation8 + $0xb8] sm:$0xff]
    %v1724 = vld [vmem:[#allocation8 + $0xc0] sm:$0xff]
    %v1725 = vld [vmem:[#allocation8 + $0xc8] sm:$0xff]
    %v1726 = vld [vmem:[#allocation8 + $0xd0] sm:$0xff]
    %v1727 = vld [vmem:[#allocation8 + $0xd8] sm:$0xff]
    %v1728 = vld [vmem:[#allocation8 + $0xe0] sm:$0xff]
    %v1729 = vld [vmem:[#allocation8 + $0xe8] sm:$0xff]
    %v1730 = vld [vmem:[#allocation8 + $0xf0] sm:$0xff]
    %v1731 = vld [vmem:[#allocation8 + $0xf8] sm:$0xff]
    %v1732 = vld [vmem:[#allocation8 + $0x100] sm:$0xff]
    %v1733 = vld [vmem:[#allocation8 + $0x108] sm:$0xff]
    %v1734 = vld [vmem:[#allocation8 + $0x110] sm:$0xff]
    %v1735 = vld [vmem:[#allocation8 + $0x118] sm:$0xff]
    %v1736 = vld [vmem:[#allocation8 + $0x120] sm:$0xff]
    %v1737 = vld [vmem:[#allocation8 + $0x128] sm:$0xff]
    %v1738 = vld [vmem:[#allocation8 + $0x130] sm:$0xff]
    %v1739 = vld [vmem:[#allocation8 + $0x138] sm:$0xff]
    %v1740 = vld [vmem:[#allocation8 + $0x140] sm:$0xff]
    %v1741 = vld [vmem:[#allocation8 + $0x148] sm:$0xff]
    %v1742 = vld [vmem:[#allocation8 + $0x150] sm:$0xff]
    %v1743 = vld [vmem:[#allocation8 + $0x158] sm:$0xff]
    %v1744 = vld [vmem:[#allocation8 + $0x160] sm:$0xff]
    %v1745 = vld [vmem:[#allocation8 + $0x168] sm:$0xff]
    %v1746 = vld [vmem:[#allocation8 + $0x170] sm:$0xff]
    %v1747 = vld [vmem:[#allocation8 + $0x178] sm:$0xff]
    %v1748 = vld [vmem:[#allocation8 + $0x180] sm:$0xff]
    %v1749 = vld [vmem:[#allocation8 + $0x188] sm:$0xff]
    %v1750 = vld [vmem:[#allocation8 + $0x190] sm:$0xff]
    %v1751 = vld [vmem:[#allocation8 + $0x198] sm:$0xff]
    %v1752 = vld [vmem:[#allocation8 + $0x1a0] sm:$0xff]
    %v1753 = vld [vmem:[#allocation8 + $0x1a8] sm:$0xff]
    %v1754 = vld [vmem:[#allocation8 + $0x1b0] sm:$0xff]
    %v1755 = vld [vmem:[#allocation8 + $0x1b8] sm:$0xff]
    %v1756 = vld [vmem:[#allocation8 + $0x1c0] sm:$0xff]
    %v1757 = vld [vmem:[#allocation8 + $0x1c8] sm:$0xff]
    %v1758 = vld [vmem:[#allocation8 + $0x1d0] sm:$0xff]
    %v1759 = vld [vmem:[#allocation8 + $0x1d8] sm:$0xff]
    %v1760 = vld [vmem:[#allocation8 + $0x1e0] sm:$0xff]
    %v1761 = vld [vmem:[#allocation8 + $0x1e8] sm:$0xff]
    %v1762 = vld [vmem:[#allocation8 + $0x1f0] sm:$0xff]
    %v1763 = vld [vmem:[#allocation8 + $0x1f8] sm:$0xff]
    %v1764 = vld [vmem:[%s5] sm:$0x3]
    %v1766 = vlaneseq
    %v1767 = vshrl.u32 %v1766, 7
    %v1768 = vsub.s32 0, %v1767
    %v1769 = vrot.slane %v1764, %v1768
    %v1770 = vlaneseq
    %v1771 = vshrl.u32 %v1770, 7
    %v1772 = vsub.s32 1, %v1771
    %v1773 = vrot.slane %v1764, %v1772
    %v1840 = vunpack.c.l.b16 %v1700
    %v1841 = vunpack.c.h.b16 %v1700
    %v1842 = vunpack.c.l.b16 %v1701
    %v1843 = vunpack.c.h.b16 %v1701
    %v1844 = vunpack.c.l.b16 %v1702
    %v1845 = vunpack.c.h.b16 %v1702
    %v1846 = vunpack.c.l.b16 %v1703
    %v1847 = vunpack.c.h.b16 %v1703
    %v1848 = vunpack.c.l.b16 %v1704
    %v1849 = vunpack.c.h.b16 %v1704
    %v1850 = vunpack.c.l.b16 %v1705
    %v1851 = vunpack.c.h.b16 %v1705
    %v1852 = vunpack.c.l.b16 %v1706
    %v1853 = vunpack.c.h.b16 %v1706
    %v1854 = vunpack.c.l.b16 %v1707
    %v1855 = vunpack.c.h.b16 %v1707
    %v1856 = vunpack.c.l.b16 %v1708
    %v1857 = vunpack.c.h.b16 %v1708
    %v1858 = vunpack.c.l.b16 %v1709
    %v1859 = vunpack.c.h.b16 %v1709
    %v1860 = vunpack.c.l.b16 %v1710
    %v1861 = vunpack.c.h.b16 %v1710
    %v1862 = vunpack.c.l.b16 %v1711
    %v1863 = vunpack.c.h.b16 %v1711
    %v1864 = vunpack.c.l.b16 %v1712
    %v1865 = vunpack.c.h.b16 %v1712
    %v1866 = vunpack.c.l.b16 %v1713
    %v1867 = vunpack.c.h.b16 %v1713
    %v1868 = vunpack.c.l.b16 %v1714
    %v1869 = vunpack.c.h.b16 %v1714
    %v1870 = vunpack.c.l.b16 %v1715
    %v1871 = vunpack.c.h.b16 %v1715
    %v1872 = vunpack.c.l.b16 %v1716
    %v1873 = vunpack.c.h.b16 %v1716
    %v1874 = vunpack.c.l.b16 %v1717
    %v1875 = vunpack.c.h.b16 %v1717
    %v1876 = vunpack.c.l.b16 %v1718
    %v1877 = vunpack.c.h.b16 %v1718
    %v1878 = vunpack.c.l.b16 %v1719
    %v1879 = vunpack.c.h.b16 %v1719
    %v1880 = vunpack.c.l.b16 %v1720
    %v1881 = vunpack.c.h.b16 %v1720
    %v1882 = vunpack.c.l.b16 %v1721
    %v1883 = vunpack.c.h.b16 %v1721
    %v1884 = vunpack.c.l.b16 %v1722
    %v1885 = vunpack.c.h.b16 %v1722
    %v1886 = vunpack.c.l.b16 %v1723
    %v1887 = vunpack.c.h.b16 %v1723
    %v1888 = vunpack.c.l.b16 %v1724
    %v1889 = vunpack.c.h.b16 %v1724
    %v1890 = vunpack.c.l.b16 %v1725
    %v1891 = vunpack.c.h.b16 %v1725
    %v1892 = vunpack.c.l.b16 %v1726
    %v1893 = vunpack.c.h.b16 %v1726
    %v1894 = vunpack.c.l.b16 %v1727
    %v1895 = vunpack.c.h.b16 %v1727
    %v1896 = vunpack.c.l.b16 %v1728
    %v1897 = vunpack.c.h.b16 %v1728
    %v1898 = vunpack.c.l.b16 %v1729
    %v1899 = vunpack.c.h.b16 %v1729
    %v1900 = vunpack.c.l.b16 %v1730
    %v1901 = vunpack.c.h.b16 %v1730
    %v1902 = vunpack.c.l.b16 %v1731
    %v1903 = vunpack.c.h.b16 %v1731
    %v1904 = vunpack.c.l.b16 %v1732
    %v1905 = vunpack.c.h.b16 %v1732
    %v1906 = vunpack.c.l.b16 %v1733
    %v1907 = vunpack.c.h.b16 %v1733
    %v1908 = vunpack.c.l.b16 %v1734
    %v1909 = vunpack.c.h.b16 %v1734
    %v1910 = vunpack.c.l.b16 %v1735
    %v1911 = vunpack.c.h.b16 %v1735
    %v1912 = vunpack.c.l.b16 %v1736
    %v1913 = vunpack.c.h.b16 %v1736
    %v1914 = vunpack.c.l.b16 %v1737
    %v1915 = vunpack.c.h.b16 %v1737
    %v1916 = vunpack.c.l.b16 %v1738
    %v1917 = vunpack.c.h.b16 %v1738
    %v1918 = vunpack.c.l.b16 %v1739
    %v1919 = vunpack.c.h.b16 %v1739
    %v1920 = vunpack.c.l.b16 %v1740
    %v1921 = vunpack.c.h.b16 %v1740
    %v1922 = vunpack.c.l.b16 %v1741
    %v1923 = vunpack.c.h.b16 %v1741
    %v1924 = vunpack.c.l.b16 %v1742
    %v1925 = vunpack.c.h.b16 %v1742
    %v1926 = vunpack.c.l.b16 %v1743
    %v1927 = vunpack.c.h.b16 %v1743
    %v1928 = vunpack.c.l.b16 %v1744
    %v1929 = vunpack.c.h.b16 %v1744
    %v1930 = vunpack.c.l.b16 %v1745
    %v1931 = vunpack.c.h.b16 %v1745
    %v1932 = vunpack.c.l.b16 %v1746
    %v1933 = vunpack.c.h.b16 %v1746
    %v1934 = vunpack.c.l.b16 %v1747
    %v1935 = vunpack.c.h.b16 %v1747
    %v1936 = vunpack.c.l.b16 %v1748
    %v1937 = vunpack.c.h.b16 %v1748
    %v1938 = vunpack.c.l.b16 %v1749
    %v1939 = vunpack.c.h.b16 %v1749
    %v1940 = vunpack.c.l.b16 %v1750
    %v1941 = vunpack.c.h.b16 %v1750
    %v1942 = vunpack.c.l.b16 %v1751
    %v1943 = vunpack.c.h.b16 %v1751
    %v1944 = vunpack.c.l.b16 %v1752
    %v1945 = vunpack.c.h.b16 %v1752
    %v1946 = vunpack.c.l.b16 %v1753
    %v1947 = vunpack.c.h.b16 %v1753
    %v1948 = vunpack.c.l.b16 %v1754
    %v1949 = vunpack.c.h.b16 %v1754
    %v1950 = vunpack.c.l.b16 %v1755
    %v1951 = vunpack.c.h.b16 %v1755
    %v1952 = vunpack.c.l.b16 %v1756
    %v1953 = vunpack.c.h.b16 %v1756
    %v1954 = vunpack.c.l.b16 %v1757
    %v1955 = vunpack.c.h.b16 %v1757
    %v1956 = vunpack.c.l.b16 %v1758
    %v1957 = vunpack.c.h.b16 %v1758
    %v1958 = vunpack.c.l.b16 %v1759
    %v1959 = vunpack.c.h.b16 %v1759
    %v1960 = vunpack.c.l.b16 %v1760
    %v1961 = vunpack.c.h.b16 %v1760
    %v1962 = vunpack.c.l.b16 %v1761
    %v1963 = vunpack.c.h.b16 %v1761
    %v1964 = vunpack.c.l.b16 %v1762
    %v1965 = vunpack.c.h.b16 %v1762
    %v1966 = vunpack.c.l.b16 %v1763
    %v1967 = vunpack.c.h.b16 %v1763
    %v1968 = vpack.c.b16 %v1842, %v1840
    %v1969 = vpack.c.b16 %v1843, %v1841
    %v1970 = vpack.c.b16 %v1846, %v1844
    %v1971 = vpack.c.b16 %v1847, %v1845
    %v1972 = vpack.c.b16 %v1850, %v1848
    %v1973 = vpack.c.b16 %v1851, %v1849
    %v1974 = vpack.c.b16 %v1854, %v1852
    %v1975 = vpack.c.b16 %v1855, %v1853
    %v1976 = vpack.c.b16 %v1858, %v1856
    %v1977 = vpack.c.b16 %v1859, %v1857
    %v1978 = vpack.c.b16 %v1862, %v1860
    %v1979 = vpack.c.b16 %v1863, %v1861
    %v1980 = vpack.c.b16 %v1866, %v1864
    %v1981 = vpack.c.b16 %v1867, %v1865
    %v1982 = vpack.c.b16 %v1870, %v1868
    %v1983 = vpack.c.b16 %v1871, %v1869
    %v1984 = vpack.c.b16 %v1874, %v1872
    %v1985 = vpack.c.b16 %v1875, %v1873
    %v1986 = vpack.c.b16 %v1878, %v1876
    %v1987 = vpack.c.b16 %v1879, %v1877
    %v1988 = vpack.c.b16 %v1882, %v1880
    %v1989 = vpack.c.b16 %v1883, %v1881
    %v1990 = vpack.c.b16 %v1886, %v1884
    %v1991 = vpack.c.b16 %v1887, %v1885
    %v1992 = vpack.c.b16 %v1890, %v1888
    %v1993 = vpack.c.b16 %v1891, %v1889
    %v1994 = vpack.c.b16 %v1894, %v1892
    %v1995 = vpack.c.b16 %v1895, %v1893
    %v1996 = vpack.c.b16 %v1898, %v1896
    %v1997 = vpack.c.b16 %v1899, %v1897
    %v1998 = vpack.c.b16 %v1902, %v1900
    %v1999 = vpack.c.b16 %v1903, %v1901
    %v2000 = vpack.c.b16 %v1906, %v1904
    %v2001 = vpack.c.b16 %v1907, %v1905
    %v2002 = vpack.c.b16 %v1910, %v1908
    %v2003 = vpack.c.b16 %v1911, %v1909
    %v2004 = vpack.c.b16 %v1914, %v1912
    %v2005 = vpack.c.b16 %v1915, %v1913
    %v2006 = vpack.c.b16 %v1918, %v1916
    %v2007 = vpack.c.b16 %v1919, %v1917
    %v2008 = vpack.c.b16 %v1922, %v1920
    %v2009 = vpack.c.b16 %v1923, %v1921
    %v2010 = vpack.c.b16 %v1926, %v1924
    %v2011 = vpack.c.b16 %v1927, %v1925
    %v2012 = vpack.c.b16 %v1930, %v1928
    %v2013 = vpack.c.b16 %v1931, %v1929
    %v2014 = vpack.c.b16 %v1934, %v1932
    %v2015 = vpack.c.b16 %v1935, %v1933
    %v2016 = vpack.c.b16 %v1938, %v1936
    %v2017 = vpack.c.b16 %v1939, %v1937
    %v2018 = vpack.c.b16 %v1942, %v1940
    %v2019 = vpack.c.b16 %v1943, %v1941
    %v2020 = vpack.c.b16 %v1946, %v1944
    %v2021 = vpack.c.b16 %v1947, %v1945
    %v2022 = vpack.c.b16 %v1950, %v1948
    %v2023 = vpack.c.b16 %v1951, %v1949
    %v2024 = vpack.c.b16 %v1954, %v1952
    %v2025 = vpack.c.b16 %v1955, %v1953
    %v2026 = vpack.c.b16 %v1958, %v1956
    %v2027 = vpack.c.b16 %v1959, %v1957
    %v2028 = vpack.c.b16 %v1962, %v1960
    %v2029 = vpack.c.b16 %v1963, %v1961
    %v2030 = vpack.c.b16 %v1966, %v1964
    %v2031 = vpack.c.b16 %v1967, %v1965
    %2096 = vmatprep.subr.bf16.mxu0 %v1983
    %2097 = vmatpush1.bf16.msra.mxu0 %v1982
    %2098 = vmatprep.subr.bf16.mxu0 %v1981
    %2099 = vmatpush1.bf16.msra.mxu0 %v1980
    %2100 = vmatprep.subr.bf16.mxu0 %v1979
    %2101 = vmatpush1.bf16.msra.mxu0 %v1978
    %2102 = vmatprep.subr.bf16.mxu0 %v1977
    %2103 = vmatpush1.bf16.msra.mxu0 %v1976
    %2104 = vmatprep.subr.bf16.mxu0 %v1975
    %2105 = vmatpush1.bf16.msra.mxu0 %v1974
    %2106 = vmatprep.subr.bf16.mxu0 %v1973
    %2107 = vmatpush1.bf16.msra.mxu0 %v1972
    %2108 = vmatprep.subr.bf16.mxu0 %v1971
    %2109 = vmatpush1.bf16.msra.mxu0 %v1970
    %2110 = vmatprep.subr.bf16.mxu0 %v1969
    %2111 = vmatpush1.bf16.msra.mxu0 %v1968
    %2112 = vmatprep.subr.bf16.mxu0 %v1999
    %2113 = vmatpush2.bf16.msra.mxu0 %v1998
    %2114 = vmatprep.subr.bf16.mxu0 %v1997
    %2115 = vmatpush2.bf16.msra.mxu0 %v1996
    %2116 = vmatprep.subr.bf16.mxu0 %v1995
    %2117 = vmatpush2.bf16.msra.mxu0 %v1994
    %2118 = vmatprep.subr.bf16.mxu0 %v1993
    %2119 = vmatpush2.bf16.msra.mxu0 %v1992
    %2120 = vmatprep.subr.bf16.mxu0 %v1991
    %2121 = vmatpush2.bf16.msra.mxu0 %v1990
    %2122 = vmatprep.subr.bf16.mxu0 %v1989
    %2123 = vmatpush2.bf16.msra.mxu0 %v1988
    %2124 = vmatprep.subr.bf16.mxu0 %v1987
    %2125 = vmatpush2.bf16.msra.mxu0 %v1986
    %2126 = vmatprep.subr.bf16.mxu0 %v1985
    %2127 = vmatpush2.bf16.msra.mxu0 %v1984
    %2128 = vmatprep.mubr.bf16.mxu0 %v1697
    %2129 = vmatmul.mubr.bf16.gmra.mxu0 %v1696
    %v2130 = vpop.f32.mrf.mxu0
    %v2131 = vadd.f32 %v1769, %v2130
    %v2132 = vpop.f32.mrf.mxu0
    %v2133 = vadd.f32 %v1773, %v2132
    %v2134 = vpop.f32.mrf.mxu0
    %v2135 = vpop.f32.mrf.mxu0
    %2136 = vdwg.mxu0
    %2137 = vmatprep.subr.bf16.mxu0 %v2015
    %2138 = vmatpush1.bf16.msra.mxu0 %v2014
    %2139 = vmatprep.subr.bf16.mxu0 %v2013
    %2140 = vmatpush1.bf16.msra.mxu0 %v2012
    %2141 = vmatprep.subr.bf16.mxu0 %v2011
    %2142 = vmatpush1.bf16.msra.mxu0 %v2010
    %2143 = vmatprep.subr.bf16.mxu0 %v2009
    %2144 = vmatpush1.bf16.msra.mxu0 %v2008
    %2145 = vmatprep.subr.bf16.mxu0 %v2007
    %2146 = vmatpush1.bf16.msra.mxu0 %v2006
    %2147 = vmatprep.subr.bf16.mxu0 %v2005
    %2148 = vmatpush1.bf16.msra.mxu0 %v2004
    %2149 = vmatprep.subr.bf16.mxu0 %v2003
    %2150 = vmatpush1.bf16.msra.mxu0 %v2002
    %2151 = vmatprep.subr.bf16.mxu0 %v2001
    %2152 = vmatpush1.bf16.msra.mxu0 %v2000
    %2153 = vmatprep.subr.bf16.mxu0 %v2031
    %2154 = vmatpush2.bf16.msra.mxu0 %v2030
    %2155 = vmatprep.subr.bf16.mxu0 %v2029
    %2156 = vmatpush2.bf16.msra.mxu0 %v2028
    %2157 = vmatprep.subr.bf16.mxu0 %v2027
    %2158 = vmatpush2.bf16.msra.mxu0 %v2026
    %2159 = vmatprep.subr.bf16.mxu0 %v2025
    %2160 = vmatpush2.bf16.msra.mxu0 %v2024
    %2161 = vmatprep.subr.bf16.mxu0 %v2023
    %2162 = vmatpush2.bf16.msra.mxu0 %v2022
    %2163 = vmatprep.subr.bf16.mxu0 %v2021
    %2164 = vmatpush2.bf16.msra.mxu0 %v2020
    %2165 = vmatprep.subr.bf16.mxu0 %v2019
    %2166 = vmatpush2.bf16.msra.mxu0 %v2018
    %2167 = vmatprep.subr.bf16.mxu0 %v2017
    %2168 = vmatpush2.bf16.msra.mxu0 %v2016
    %2169 = vmatprep.mubr.bf16.mxu0 %v1699
    %2170 = vmatmul.mubr.bf16.gmra.mxu0 %v1698
    %v2171 = vpop.f32.mrf.mxu0
    %v2172 = vadd.f32 %v2131, %v2171
    %v2173 = vpop.f32.mrf.mxu0
    %v2174 = vadd.f32 %v2133, %v2173
    %v2175 = vpop.f32.mrf.mxu0
    %v2176 = vpop.f32.mrf.mxu0
    %2177 = vdwg.mxu0
    %v2178 = vmax.f32 %v2172, 0.0
    %v2179 = vmax.f32 %v2174, 0.0
    %v2180 = vpack.c.bf16 %v2178, %v2178
    %v2181 = vpack.c.bf16 %v2179, %v2179
    %v2182 = vld [vmem:[#allocation10] sm:$0xf]
    %v2183 = vld [vmem:[#allocation10 + $0x4] sm:$0xf]
    %v2184 = vld [vmem:[#allocation10 + $0x8] sm:$0xf]
    %v2185 = vld [vmem:[#allocation10 + $0xc] sm:$0xf]
    %v2186 = vld [vmem:[#allocation10 + $0x10] sm:$0xf]
    %v2187 = vld [vmem:[#allocation10 + $0x14] sm:$0xf]
    %v2188 = vld [vmem:[#allocation10 + $0x18] sm:$0xf]
    %v2189 = vld [vmem:[#allocation10 + $0x1c] sm:$0xf]
    %v2190 = vld [vmem:[#allocation10 + $0x20] sm:$0xf]
    %v2191 = vld [vmem:[#allocation10 + $0x24] sm:$0xf]
    %v2192 = vld [vmem:[#allocation10 + $0x28] sm:$0xf]
    %v2193 = vld [vmem:[#allocation10 + $0x2c] sm:$0xf]
    %v2194 = vld [vmem:[#allocation10 + $0x30] sm:$0xf]
    %v2195 = vld [vmem:[#allocation10 + $0x34] sm:$0xf]
    %v2196 = vld [vmem:[#allocation10 + $0x38] sm:$0xf]
    %v2197 = vld [vmem:[#allocation10 + $0x3c] sm:$0xf]
    %v2198 = vld [vmem:[#allocation10 + $0x40] sm:$0xf]
    %v2199 = vld [vmem:[#allocation10 + $0x44] sm:$0xf]
    %v2200 = vld [vmem:[#allocation10 + $0x48] sm:$0xf]
    %v2201 = vld [vmem:[#allocation10 + $0x4c] sm:$0xf]
    %v2202 = vld [vmem:[#allocation10 + $0x50] sm:$0xf]
    %v2203 = vld [vmem:[#allocation10 + $0x54] sm:$0xf]
    %v2204 = vld [vmem:[#allocation10 + $0x58] sm:$0xf]
    %v2205 = vld [vmem:[#allocation10 + $0x5c] sm:$0xf]
    %v2206 = vld [vmem:[#allocation10 + $0x60] sm:$0xf]
    %v2207 = vld [vmem:[#allocation10 + $0x64] sm:$0xf]
    %v2208 = vld [vmem:[#allocation10 + $0x68] sm:$0xf]
    %v2209 = vld [vmem:[#allocation10 + $0x6c] sm:$0xf]
    %v2210 = vld [vmem:[#allocation10 + $0x70] sm:$0xf]
    %v2211 = vld [vmem:[#allocation10 + $0x74] sm:$0xf]
    %v2212 = vld [vmem:[#allocation10 + $0x78] sm:$0xf]
    %v2213 = vld [vmem:[#allocation10 + $0x7c] sm:$0xf]
    %v2214 = vld [vmem:[%s7] sm:$0x1]
    %v2216 = vlaneseq
    %v2217 = vshrl.u32 %v2216, 7
    %v2218 = vsub.s32 0, %v2217
    %v2219 = vrot.slane %v2214, %v2218
    %v2253 = vunpack.c.l.b16 %v2182
    %v2254 = vunpack.c.l.b16 %v2183
    %v2255 = vunpack.c.l.b16 %v2184
    %v2256 = vunpack.c.l.b16 %v2185
    %v2257 = vunpack.c.l.b16 %v2186
    %v2258 = vunpack.c.l.b16 %v2187
    %v2259 = vunpack.c.l.b16 %v2188
    %v2260 = vunpack.c.l.b16 %v2189
    %v2261 = vunpack.c.l.b16 %v2190
    %v2262 = vunpack.c.l.b16 %v2191
    %v2263 = vunpack.c.l.b16 %v2192
    %v2264 = vunpack.c.l.b16 %v2193
    %v2265 = vunpack.c.l.b16 %v2194
    %v2266 = vunpack.c.l.b16 %v2195
    %v2267 = vunpack.c.l.b16 %v2196
    %v2268 = vunpack.c.l.b16 %v2197
    %v2269 = vunpack.c.l.b16 %v2198
    %v2270 = vunpack.c.l.b16 %v2199
    %v2271 = vunpack.c.l.b16 %v2200
    %v2272 = vunpack.c.l.b16 %v2201
    %v2273 = vunpack.c.l.b16 %v2202
    %v2274 = vunpack.c.l.b16 %v2203
    %v2275 = vunpack.c.l.b16 %v2204
    %v2276 = vunpack.c.l.b16 %v2205
    %v2277 = vunpack.c.l.b16 %v2206
    %v2278 = vunpack.c.l.b16 %v2207
    %v2279 = vunpack.c.l.b16 %v2208
    %v2280 = vunpack.c.l.b16 %v2209
    %v2281 = vunpack.c.l.b16 %v2210
    %v2282 = vunpack.c.l.b16 %v2211
    %v2283 = vunpack.c.l.b16 %v2212
    %v2284 = vunpack.c.l.b16 %v2213
    %v2285 = vpack.c.b16 %v2254, %v2253
    %v2286 = vpack.c.b16 %v2256, %v2255
    %v2287 = vpack.c.b16 %v2258, %v2257
    %v2288 = vpack.c.b16 %v2260, %v2259
    %v2289 = vpack.c.b16 %v2262, %v2261
    %v2290 = vpack.c.b16 %v2264, %v2263
    %v2291 = vpack.c.b16 %v2266, %v2265
    %v2292 = vpack.c.b16 %v2268, %v2267
    %v2293 = vpack.c.b16 %v2270, %v2269
    %v2294 = vpack.c.b16 %v2272, %v2271
    %v2295 = vpack.c.b16 %v2274, %v2273
    %v2296 = vpack.c.b16 %v2276, %v2275
    %v2297 = vpack.c.b16 %v2278, %v2277
    %v2298 = vpack.c.b16 %v2280, %v2279
    %v2299 = vpack.c.b16 %v2282, %v2281
    %v2300 = vpack.c.b16 %v2284, %v2283
    %2317 = vmatprep.subr.bf16.mxu0 0
    %2318 = vmatpush1.bf16.msra.mxu0 %v2292
    %2319 = vmatprep.subr.bf16.mxu0 0
    %2320 = vmatpush1.bf16.msra.mxu0 %v2291
    %2321 = vmatprep.subr.bf16.mxu0 0
    %2322 = vmatpush1.bf16.msra.mxu0 %v2290
    %2323 = vmatprep.subr.bf16.mxu0 0
    %2324 = vmatpush1.bf16.msra.mxu0 %v2289
    %2325 = vmatprep.subr.bf16.mxu0 0
    %2326 = vmatpush1.bf16.msra.mxu0 %v2288
    %2327 = vmatprep.subr.bf16.mxu0 0
    %2328 = vmatpush1.bf16.msra.mxu0 %v2287
    %2329 = vmatprep.subr.bf16.mxu0 0
    %2330 = vmatpush1.bf16.msra.mxu0 %v2286
    %2331 = vmatprep.subr.bf16.mxu0 0
    %2332 = vmatpush1.bf16.msra.mxu0 %v2285
    %2333 = vmatprep.subr.bf16.mxu0 0
    %2334 = vmatpush2.bf16.msra.mxu0 %v2300
    %2335 = vmatprep.subr.bf16.mxu0 0
    %2336 = vmatpush2.bf16.msra.mxu0 %v2299
    %2337 = vmatprep.subr.bf16.mxu0 0
    %2338 = vmatpush2.bf16.msra.mxu0 %v2298
    %2339 = vmatprep.subr.bf16.mxu0 0
    %2340 = vmatpush2.bf16.msra.mxu0 %v2297
    %2341 = vmatprep.subr.bf16.mxu0 0
    %2342 = vmatpush2.bf16.msra.mxu0 %v2296
    %2343 = vmatprep.subr.bf16.mxu0 0
    %2344 = vmatpush2.bf16.msra.mxu0 %v2295
    %2345 = vmatprep.subr.bf16.mxu0 0
    %2346 = vmatpush2.bf16.msra.mxu0 %v2294
    %2347 = vmatprep.subr.bf16.mxu0 0
    %2348 = vmatpush2.bf16.msra.mxu0 %v2293
    %2349 = vmatprep.mubr.bf16.mxu0 %v2181
    %2350 = vmatmul.mubr.bf16.gmra.mxu0 %v2180
    %v2351 = vpop.f32.mrf.mxu0
    %v2352 = vadd.f32 %v2219, %v2351
    %v2353 = vpop.f32.mrf.mxu0
    %v2354 = vpop.f32.mrf.mxu0
    %v2355 = vpop.f32.mrf.mxu0
    %2356 = vdwg.mxu0
    %v2357 = vlaneseq
    %v2358 = vand.u32 %v2357, 127
    %2359 = vrot.lane.b32.xlu0 %v2352, 64
    %v2360 = vpop.permute.xlu0 %2359
    %vm2361 = vcmp.lt.s32.totalorder %v2358, 64
    %v2362 = vsel %vm2361, %v2360, 0.0
    %v2363 = vmul.f32 %v2362, 0.5
    %v2364 = vmul.f32 %v2363, 1.442695
    %v2365 = vpow.pop %v2364
    %v2366 = vld [vmem:[#allocation5] sm:$0xf]
    %v2367 = vunpack.c.l.bf16 %v2366
    %v2368 = vmul.f32 %v2367, %v2365
    %v2369 = vadd.f32 %v2352, %v2368
    %v2370 = vpack.c.bf16 %v2369, %v2369
    %v2371 = vld [vmem:[#allocation11] sm:$0xf]
    %v2372 = vld [vmem:[#allocation11 + $0x4] sm:$0xf]
    %v2373 = vld [vmem:[#allocation11 + $0x8] sm:$0xf]
    %v2374 = vld [vmem:[#allocation11 + $0xc] sm:$0xf]
    %v2375 = vld [vmem:[#allocation11 + $0x10] sm:$0xf]
    %v2376 = vld [vmem:[#allocation11 + $0x14] sm:$0xf]
    %v2377 = vld [vmem:[#allocation11 + $0x18] sm:$0xf]
    %v2378 = vld [vmem:[#allocation11 + $0x1c] sm:$0xf]
    %v2379 = vld [vmem:[#allocation11 + $0x20] sm:$0xf]
    %v2380 = vld [vmem:[#allocation11 + $0x24] sm:$0xf]
    %v2381 = vld [vmem:[#allocation11 + $0x28] sm:$0xf]
    %v2382 = vld [vmem:[#allocation11 + $0x2c] sm:$0xf]
    %v2383 = vld [vmem:[#allocation11 + $0x30] sm:$0xf]
    %v2384 = vld [vmem:[#allocation11 + $0x34] sm:$0xf]
    %v2385 = vld [vmem:[#allocation11 + $0x38] sm:$0xf]
    %v2386 = vld [vmem:[#allocation11 + $0x3c] sm:$0xf]
    %v2387 = vld [vmem:[%s9] sm:$0x1]
    %v2389 = vlaneseq
    %v2390 = vshrl.u32 %v2389, 7
    %v2391 = vsub.s32 0, %v2390
    %v2392 = vrot.slane %v2387, %v2391
    %v2410 = vunpack.c.l.b16 %v2371
    %v2411 = vunpack.c.l.b16 %v2372
    %v2412 = vunpack.c.l.b16 %v2373
    %v2413 = vunpack.c.l.b16 %v2374
    %v2414 = vunpack.c.l.b16 %v2375
    %v2415 = vunpack.c.l.b16 %v2376
    %v2416 = vunpack.c.l.b16 %v2377
    %v2417 = vunpack.c.l.b16 %v2378
    %v2418 = vunpack.c.l.b16 %v2379
    %v2419 = vunpack.c.l.b16 %v2380
    %v2420 = vunpack.c.l.b16 %v2381
    %v2421 = vunpack.c.l.b16 %v2382
    %v2422 = vunpack.c.l.b16 %v2383
    %v2423 = vunpack.c.l.b16 %v2384
    %v2424 = vunpack.c.l.b16 %v2385
    %v2425 = vunpack.c.l.b16 %v2386
    %v2426 = vpack.c.b16 %v2411, %v2410
    %v2427 = vpack.c.b16 %v2413, %v2412
    %v2428 = vpack.c.b16 %v2415, %v2414
    %v2429 = vpack.c.b16 %v2417, %v2416
    %v2430 = vpack.c.b16 %v2419, %v2418
    %v2431 = vpack.c.b16 %v2421, %v2420
    %v2432 = vpack.c.b16 %v2423, %v2422
    %v2433 = vpack.c.b16 %v2425, %v2424
    %2442 = vmatprep.subr.bf16.mxu0 0
    %2443 = vmatpush1.bf16.msra.mxu0 %v2433
    %2444 = vmatprep.subr.bf16.mxu0 0
    %2445 = vmatpush1.bf16.msra.mxu0 %v2432
    %2446 = vmatprep.subr.bf16.mxu0 0
    %2447 = vmatpush1.bf16.msra.mxu0 %v2431
    %2448 = vmatprep.subr.bf16.mxu0 0
    %2449 = vmatpush1.bf16.msra.mxu0 %v2430
    %2450 = vmatprep.subr.bf16.mxu0 0
    %2451 = vmatpush1.bf16.msra.mxu0 %v2429
    %2452 = vmatprep.subr.bf16.mxu0 0
    %2453 = vmatpush1.bf16.msra.mxu0 %v2428
    %2454 = vmatprep.subr.bf16.mxu0 0
    %2455 = vmatpush1.bf16.msra.mxu0 %v2427
    %2456 = vmatprep.subr.bf16.mxu0 0
    %2457 = vmatpush1.bf16.msra.mxu0 %v2426
    %2458 = vmatprep.subr.bf16.mxu0 0
    %2459 = vmatpush2.bf16.msra.mxu0 0
    %2460 = vmatprep.subr.bf16.mxu0 0
    %2461 = vmatpush2.bf16.msra.mxu0 0
    %2462 = vmatprep.subr.bf16.mxu0 0
    %2463 = vmatpush2.bf16.msra.mxu0 0
    %2464 = vmatprep.subr.bf16.mxu0 0
    %2465 = vmatpush2.bf16.msra.mxu0 0
    %2466 = vmatprep.subr.bf16.mxu0 0
    %2467 = vmatpush2.bf16.msra.mxu0 0
    %2468 = vmatprep.subr.bf16.mxu0 0
    %2469 = vmatpush2.bf16.msra.mxu0 0
    %2470 = vmatprep.subr.bf16.mxu0 0
    %2471 = vmatpush2.bf16.msra.mxu0 0
    %2472 = vmatprep.subr.bf16.mxu0 0
    %2473 = vmatpush2.bf16.msra.mxu0 0
    %2474 = vmatprep.mubr.bf16.mxu0 0
    %2475 = vmatmul.mubr.bf16.gmra.mxu0 %v2370
    %v2476 = vpop.f32.mrf.mxu0
    %v2477 = vadd.f32 %v2392, %v2476
    %v2478 = vpop.f32.mrf.mxu0
    %v2479 = vpop.f32.mrf.mxu0
    %v2480 = vpop.f32.mrf.mxu0
    %2481 = vdwg.mxu0
    %v2482 = vmax.f32 %v2477, 0.0
    %v2483 = vpack.c.bf16 %v2482, %v2482
    %v2484 = vld [vmem:[#allocation13] sm:$0xf]
    %v2485 = vld [vmem:[#allocation13 + $0x4] sm:$0xf]
    %v2486 = vld [vmem:[#allocation13 + $0x8] sm:$0xf]
    %v2487 = vld [vmem:[#allocation13 + $0xc] sm:$0xf]
    %v2488 = vld [vmem:[#allocation13 + $0x10] sm:$0xf]
    %v2489 = vld [vmem:[#allocation13 + $0x14] sm:$0xf]
    %v2490 = vld [vmem:[#allocation13 + $0x18] sm:$0xf]
    %v2491 = vld [vmem:[#allocation13 + $0x1c] sm:$0xf]
    %v2492 = vld [vmem:[#allocation13 + $0x20] sm:$0xf]
    %v2493 = vld [vmem:[#allocation13 + $0x24] sm:$0xf]
    %v2494 = vld [vmem:[#allocation13 + $0x28] sm:$0xf]
    %v2495 = vld [vmem:[#allocation13 + $0x2c] sm:$0xf]
    %v2496 = vld [vmem:[#allocation13 + $0x30] sm:$0xf]
    %v2497 = vld [vmem:[#allocation13 + $0x34] sm:$0xf]
    %v2498 = vld [vmem:[#allocation13 + $0x38] sm:$0xf]
    %v2499 = vld [vmem:[#allocation13 + $0x3c] sm:$0xf]
    %v2500 = vld [vmem:[%s11] sm:$0x1]
    %v2502 = vlaneseq
    %v2503 = vshrl.u32 %v2502, 7
    %v2504 = vsub.s32 0, %v2503
    %v2505 = vrot.slane %v2500, %v2504
    %v2523 = vunpack.c.l.b16 %v2484
    %v2524 = vunpack.c.l.b16 %v2485
    %v2525 = vunpack.c.l.b16 %v2486
    %v2526 = vunpack.c.l.b16 %v2487
    %v2527 = vunpack.c.l.b16 %v2488
    %v2528 = vunpack.c.l.b16 %v2489
    %v2529 = vunpack.c.l.b16 %v2490
    %v2530 = vunpack.c.l.b16 %v2491
    %v2531 = vunpack.c.l.b16 %v2492
    %v2532 = vunpack.c.l.b16 %v2493
    %v2533 = vunpack.c.l.b16 %v2494
    %v2534 = vunpack.c.l.b16 %v2495
    %v2535 = vunpack.c.l.b16 %v2496
    %v2536 = vunpack.c.l.b16 %v2497
    %v2537 = vunpack.c.l.b16 %v2498
    %v2538 = vunpack.c.l.b16 %v2499
    %v2539 = vpack.c.b16 %v2524, %v2523
    %v2540 = vpack.c.b16 %v2526, %v2525
    %v2541 = vpack.c.b16 %v2528, %v2527
    %v2542 = vpack.c.b16 %v2530, %v2529
    %v2543 = vpack.c.b16 %v2532, %v2531
    %v2544 = vpack.c.b16 %v2534, %v2533
    %v2545 = vpack.c.b16 %v2536, %v2535
    %v2546 = vpack.c.b16 %v2538, %v2537
    %2555 = vmatprep.subr.bf16.mxu0 0
    %2556 = vmatpush1.bf16.msra.mxu0 %v2546
    %2557 = vmatprep.subr.bf16.mxu0 0
    %2558 = vmatpush1.bf16.msra.mxu0 %v2545
    %2559 = vmatprep.subr.bf16.mxu0 0
    %2560 = vmatpush1.bf16.msra.mxu0 %v2544
    %2561 = vmatprep.subr.bf16.mxu0 0
    %2562 = vmatpush1.bf16.msra.mxu0 %v2543
    %2563 = vmatprep.subr.bf16.mxu0 0
    %2564 = vmatpush1.bf16.msra.mxu0 %v2542
    %2565 = vmatprep.subr.bf16.mxu0 0
    %2566 = vmatpush1.bf16.msra.mxu0 %v2541
    %2567 = vmatprep.subr.bf16.mxu0 0
    %2568 = vmatpush1.bf16.msra.mxu0 %v2540
    %2569 = vmatprep.subr.bf16.mxu0 0
    %2570 = vmatpush1.bf16.msra.mxu0 %v2539
    %2571 = vmatprep.subr.bf16.mxu0 0
    %2572 = vmatpush2.bf16.msra.mxu0 0
    %2573 = vmatprep.subr.bf16.mxu0 0
    %2574 = vmatpush2.bf16.msra.mxu0 0
    %2575 = vmatprep.subr.bf16.mxu0 0
    %2576 = vmatpush2.bf16.msra.mxu0 0
    %2577 = vmatprep.subr.bf16.mxu0 0
    %2578 = vmatpush2.bf16.msra.mxu0 0
    %2579 = vmatprep.subr.bf16.mxu0 0
    %2580 = vmatpush2.bf16.msra.mxu0 0
    %2581 = vmatprep.subr.bf16.mxu0 0
    %2582 = vmatpush2.bf16.msra.mxu0 0
    %2583 = vmatprep.subr.bf16.mxu0 0
    %2584 = vmatpush2.bf16.msra.mxu0 0
    %2585 = vmatprep.subr.bf16.mxu0 0
    %2586 = vmatpush2.bf16.msra.mxu0 0
    %2587 = vmatprep.mubr.bf16.mxu0 0
    %2588 = vmatmul.mubr.bf16.gmra.mxu0 %v2483
    %v2589 = vpop.f32.mrf.mxu0
    %v2590 = vadd.f32 %v2505, %v2589
    %v2591 = vpop.f32.mrf.mxu0
    %v2592 = vpop.f32.mrf.mxu0
    %v2593 = vpop.f32.mrf.mxu0
    %2594 = vdwg.mxu0
    %v2595 = vsel %vm2361, %v2369, %v2590
    %2596 = vst [vmem:[#allocation14] sm:$0xff] %v2595
    // Predicated region
    $region78: #{tpu_custom_call.1} parent=1 // pred_check
      _
    $region79: #{tpu_custom_call.1} parent=1 // pred_check_branch
      %2598 = sbr.rel (0) target = $region81
    $region80: #{tpu_custom_call.1} parent=1 // pred_region
      %s2600 = ssub.s32 128, 128
      %2601 = vsyncadd [#allocation4], %s2600
      %s2603 = sshll.u32 [#allocation14], 4
      %s2604 = int_to_ptr.vmem [resolvable:$true] %s2603
      %2606 = dma.vmem_to_hbm [thread:$0]  %s2604, 128, %s12, [#allocation4]
    $region81: #{tpu_custom_call.1} parent=1 // pred_fallthru
      _
    // Predicated region
    $region82: #{tpu_custom_call.1} parent=1 // pred_check
      _
    $region83: #{tpu_custom_call.1} parent=1 // pred_check_branch
      %2608 = sbr.rel (0) target = $region85
    $region84: #{tpu_custom_call.1} parent=1 // pred_region
      %2609 = dma.done [#allocation4], 128
    $region85: #{tpu_custom_call.1} parent=1 // pred_fallthru
      _
    %2610 = vsyncpa [#allocation3], 1
    %2611 = vsyncpa [#allocation6], 1
    %2612 = vsyncpa [#allocation9], 1
    %2613 = vsyncpa [#allocation12], 1
    %2614 = vsyncpa [#allocation4], 1

</llo_original>
